<compile_context>
chip_gen: v6e
topology: v6e:2x2x1
jax: 0.10.0
libtpu: 0.0.40
codegen_flags: <defaults>
</compile_context>

<pallas_src>
import math

import jax
import jax.numpy as jnp
from jax import lax
from jax.experimental import pallas as pl
from jax.experimental.pallas import tpu as pltpu


def _make_kernel(Bc, N, K):
    """Kernel body with static Bc (episodes/step), N (nodes/episode), K (top-k)."""

    def kernel(feat_ref, w_ref, b_ref, aifa_ref, out_ref):
        f = feat_ref[...].astype(jnp.float32)                     # (Bc, N, D)

        # ---- pairwise squared distances via per-episode Gram matrices (MXU) --
        gram = jnp.einsum("bnd,bmd->bnm", f, f,
                          preferred_element_type=jnp.float32)     # (Bc, N, N)

        row_i = lax.broadcasted_iota(jnp.int32, (Bc, N, N), 1)
        col_j = lax.broadcasted_iota(jnp.int32, (Bc, N, N), 2)
        eye_b = row_i == col_j
        eye_f = eye_b.astype(jnp.float32)

        # |f_i|^2 in both row / column orientations straight from the Gram
        # diagonal (two small reductions, no transpose needed).
        diag = gram * eye_f
        sq_row = jnp.sum(diag, axis=2, keepdims=True)             # (Bc, N, 1)
        sq_col = jnp.sum(diag, axis=1, keepdims=True)             # (Bc, 1, N)
        dist2 = jnp.maximum(sq_row + sq_col - 2.0 * gram, 0.0)
        E = jnp.exp(dist2 * (-1.0 / 9.0))                         # adjacency_e

        # ---- per-row top-K mask (iterative max, ties -> first column) --------
        # E[i,i] = exp(0) = 1 is always the row max, i.e. the first top-k pick,
        # and torch then zeroes it (adjacency0[num, num] = 0), so seed the mask
        # with the identity and select only K-1 more columns.  `cur` is carried
        # and each picked column knocked out, so every pick costs exactly one
        # max and one tie-breaking min reduction.
        mask0 = eye_f
        cur0 = jnp.where(eye_b, -jnp.inf, E)

        def select_one(_, carry):
            mask, cur = carry
            m = jnp.max(cur, axis=2, keepdims=True)
            first = jnp.min(jnp.where(cur >= m, col_j, N), axis=2, keepdims=True)
            hit = col_j == first
            return mask + hit.astype(jnp.float32), jnp.where(hit, -jnp.inf, cur)

        if K > 1:
            mask, _ = lax.fori_loop(0, K - 1, select_one, (mask0, cur0),
                                    unroll=True)
        else:
            mask = mask0

        adj0 = mask - eye_f                  # zero the diagonal
        A1 = eye_f + adj0 * E                # I + masked adjacency_e

        # ---- symmetric normalization + alpha mixture, re-associated ----------
        #   An = Dr @ A1 @ Dr,  Dr = diag(d^-1/2),  d = rowsum(A1) + 1
        #   A @ f = a0*f + a1*An@f + a2*An^2@f
        #         = a0*f + a1*Dr A1 (Dr f) + a2*Dr A1 D^-1 A1 (Dr f)
        # Only per-row scalings + two tiny batched bf16 matmuls; An / An^2 are
        # never materialized and no column-broadcast transpose is needed.
        d = jnp.sum(A1, axis=2, keepdims=True) + 1.0              # (Bc, N, 1)
        dr = lax.rsqrt(d)                                         # d^-1/2 (EUP)
        dinv = dr * dr                                            # d^-1

        a0 = aifa_ref[0]
        a1 = aifa_ref[1]
        a2 = aifa_ref[2]

        A1_bf = A1.astype(jnp.bfloat16)
        t0 = (f * dr).astype(jnp.bfloat16)                        # Dr f
        t1 = jnp.einsum("bij,bjd->bid", A1_bf, t0,
                        preferred_element_type=jnp.float32)       # A1 Dr f
        anf = t1 * dr                                             # An f
        t2 = (t1 * dinv).astype(jnp.bfloat16)                     # D^-1 A1 Dr f
        t3 = jnp.einsum("bij,bjd->bid", A1_bf, t2,
                        preferred_element_type=jnp.float32)       # A1 D^-1 A1 Dr f
        an2f = t3 * dr                                            # An^2 f
        af = a0 * f + a1 * anf + a2 * an2f                        # A @ f  (Bc,N,D)

        # ---- GCN with eval-mode BN + bias folded into W'/b' -------------------
        #   relu((A @ f) @ W' + b') — the single FLOP-heavy matmul runs as one
        #   lane/sublane-dense (Bc*N, D) @ (D, 512) bf16 MXU op, f32 accumulate.
        af2 = af.reshape(Bc * N, -1).astype(jnp.bfloat16)
        x = jnp.dot(af2, w_ref[...], preferred_element_type=jnp.float32)
        out_ref[...] = jnp.maximum(x + b_ref[...], 0.0)

    return kernel


def _choose_block_b(B, N):
    """Episodes per grid step.

    Targets Bc*N >= 256 rows for the heavy (Bc*N, D) @ (D, 512) matmul so the
    256-wide MXUs on v6e/v7x (128-wide on v5e) see full rows, while keeping at
    least 2 evenly sized grid steps when the batch allows so both of v7x's
    TensorCores get work (harmless on the single-TC v5e/v6e).
    """
    per_step = max(1, -(-256 // N))          # ceil(256 / N)
    if B >= 2 * per_step:
        bc = per_step
    elif B >= 2:
        bc = -(-B // 2)                      # two evenly sized steps
    else:
        bc = B
    # The output is stored as a flat lane-dense (Bc*N, 512) block; keep its
    # sublane dim 8-aligned unless there is a single grid step anyway.
    if (bc * N) % 8 != 0 and bc < B:
        bc = B
    return bc


def multigcn_512_forward(features, params, n_way):
    """features: (B, N, D) or (N, D) float32.  Returns (B, N, 512) / (N, 512)."""
    squeeze = features.ndim == 2
    if squeeze:
        features = features[None]
    B, N, D = features.shape
    K = int(round(N / n_way))                # round(N / test_N_way), as in PyTorch
    OUT = params["gcn_weight"].shape[1]

    # Fold eval-mode BatchNorm1d(512) + GCN bias into the weight / bias:
    #   relu(bn2(A@(f@W) + b)) == relu((A@f)@W' + b'),
    #   W' = W*s, b' = (b - mean)*s + beta, s = gamma / sqrt(var + eps).
    scale = params["bn2_gamma"] * lax.rsqrt(params["bn2_var"] + 1e-5)    # (1, OUT)
    w_fused = (params["gcn_weight"] * scale).astype(jnp.bfloat16)        # (D, OUT)
    b_fused = (params["bn2_beta"]
               + (params["gcn_bias"] - params["bn2_mean"]) * scale)      # (1, OUT)

    # softmax over [aifa1, aifa2, aifa3] (3 scalars; tiny host-side glue)
    aifa = jax.nn.softmax(
        jnp.concatenate([params["aifa1"], params["aifa2"], params["aifa3"]]))

    Bc = _choose_block_b(B, N)
    G = pl.cdiv(B, Bc)
    B_pad = G * Bc
    if B_pad != B:
        # Zero-padded episodes are independent, NaN-free, and sliced away below.
        features = jnp.pad(features, ((0, B_pad - B), (0, 0), (0, 0)))

    kernel = _make_kernel(Bc, N, K)
    out_flat = pl.pallas_call(
        kernel,
        out_shape=jax.ShapeDtypeStruct((B_pad * N, OUT), jnp.float32),
        grid=(G,),
        in_specs=[
            pl.BlockSpec((Bc, N, D), lambda g: (g, 0, 0)),      # Bc episodes / step
            pl.BlockSpec((D, OUT), lambda g: (0, 0)),           # fused weight (resident)
            pl.BlockSpec((1, OUT), lambda g: (0, 0)),           # fused bias   (resident)
            pl.BlockSpec(memory_space=pltpu.MemorySpace.SMEM),  # aifa (3,) scalars
        ],
        out_specs=pl.BlockSpec((Bc * N, OUT), lambda g: (g, 0)),
        compiler_params=pltpu.CompilerParams(
            dimension_semantics=("parallel",)),
    )(features, w_fused, b_fused, aifa)

    out = out_flat.reshape(B_pad, N, OUT)[:B]
    # TODO(synk): F.dropout(p=0.6) skipped — eval-mode forward (identity).
    # TODO(synk): for N ~ 1K+ scaling, additionally tile the (N, N) adjacency
    # stage over row blocks and set pltpu.CompilerParams(vmem_limit_bytes=...)
    # (v7x has only 64 MiB VMEM, 32 MiB scoped default).
    return out[0] if squeeze else out


def init_params(key, input_dim, out_dim=512):
    """Deterministic parameter init mirroring the module's __init__ (eval mode)."""
    # kaiming_uniform_ (fan_in, gain=sqrt(2)) -> bound = sqrt(6 / fan_in)
    bound = math.sqrt(6.0 / input_dim)
    gcn_w = jax.random.uniform(key, (input_dim, out_dim), jnp.float32,
                               minval=-bound, maxval=bound)
    return {
        "gcn_weight": gcn_w,
        "gcn_bias": jnp.zeros((1, out_dim), jnp.float32),
        "bn2_gamma": jnp.ones((1, out_dim), jnp.float32),
        "bn2_beta": jnp.zeros((1, out_dim), jnp.float32),
        "bn2_mean": jnp.zeros((1, out_dim), jnp.float32),
        "bn2_var": jnp.ones((1, out_dim), jnp.float32),
        "aifa1": jnp.zeros((1,), jnp.float32),
        "aifa2": jnp.zeros((1,), jnp.float32),
        "aifa3": jnp.zeros((1,), jnp.float32),
    }


if __name__ == "__main__":
    B, N, INPUT_DIM, N_WAY = 8, 16, 64, 4

    key = jax.random.PRNGKey(0)
    k_feat, k_param = jax.random.split(key)
    features = jax.random.normal(k_feat, (B, N, INPUT_DIM), jnp.float32)
    params = init_params(k_param, INPUT_DIM)

    out = multigcn_512_forward(features, params, N_WAY)
    out = jax.block_until_ready(out)
    assert out.shape == (B, N, 512) and out.dtype == jnp.float32
    print("KERNEL_OK")
</pallas_src>

<mosaic_0001>
module attributes {stable_mosaic.version = 11 : i64} {
  func.func @kernel(%arg0: i32, %arg1: memref<4x16x64xf32, #tpu.memory_space<vmem>>, %arg2: memref<64x512xbf16, #tpu.memory_space<vmem>>, %arg3: memref<1x512xf32, #tpu.memory_space<vmem>>, %arg4: memref<3xf32, #tpu.memory_space<smem>>, %arg5: memref<64x512xf32, #tpu.memory_space<vmem>>) attributes {dimension_semantics = [#tpu.dimension_semantics<parallel>], iteration_bounds = array<i64: 2>, scalar_prefetch = 0 : i64, scratch_operands = 0 : i64, tpu.core_type = #tpu.core_type<tc>, window_params = [{transform_indices = @transform_0, window_bounds = array<i64: 4, 16, 64>}, {pipeline_mode = #tpu.pipeline_mode<synchronous>, transform_indices = @transform_1, window_bounds = array<i64: 64, 512>}, {pipeline_mode = #tpu.pipeline_mode<synchronous>, transform_indices = @transform_2, window_bounds = array<i64: 1, 512>}, {transform_indices = @transform_3, window_bounds = array<i64: 3>}, {transform_indices = @transform_4, window_bounds = array<i64: 64, 512>}]} {
    %c0 = arith.constant 0 : index
    %c0_0 = arith.constant 0 : index
    %c0_1 = arith.constant 0 : index
    %0 = vector.load %arg1[%c0, %c0_0, %c0_1] : memref<4x16x64xf32, #tpu.memory_space<vmem>>, vector<4x16x64xf32>
    "tpu.trace_start"() <{level = 10 : i32, message = "bnd,bmd->bnm"}> : () -> ()
    %cst = arith.constant dense<0.000000e+00> : vector<4x16x16xf32>
    %1 = tpu.matmul %0, %0, %cst {dimension_numbers = #tpu.dot_dimension_numbers<[2], [2], [1], [1], [0, 0, 0, 1, 1, 1], [0], [0]>} : vector<4x16x64xf32>, vector<4x16x64xf32>, vector<4x16x16xf32> -> vector<4x16x16xf32>
    "tpu.trace_stop"() : () -> ()
    %2 = tpu.iota {dimensions = array<i32: 1>} : vector<4x16x16xi32>
    %3 = tpu.iota {dimensions = array<i32: 2>} : vector<4x16x16xi32>
    %4 = arith.cmpi eq, %2, %3 : vector<4x16x16xi32>
    %5 = arith.extui %4 : vector<4x16x16xi1> to vector<4x16x16xi32>
    %6 = arith.sitofp %5 : vector<4x16x16xi32> to vector<4x16x16xf32>
    %7 = arith.mulf %1, %6 : vector<4x16x16xf32>
    %cst_2 = arith.constant dense<0.000000e+00> : vector<4x16xf32>
    %8 = vector.multi_reduction <add>, %7, %cst_2 [2] : vector<4x16x16xf32> to vector<4x16xf32>
    %9 = vector.shape_cast %8 : vector<4x16xf32> to vector<4x16x1xf32>
    %cst_3 = arith.constant dense<0.000000e+00> : vector<4x16xf32>
    %10 = vector.multi_reduction <add>, %7, %cst_3 [1] : vector<4x16x16xf32> to vector<4x16xf32>
    %11 = vector.shape_cast %10 : vector<4x16xf32> to vector<4x1x16xf32>
    %12 = vector.broadcast %9 : vector<4x16x1xf32> to vector<4x16x16xf32>
    %13 = vector.broadcast %11 : vector<4x1x16xf32> to vector<4x16x16xf32>
    %14 = arith.addf %12, %13 : vector<4x16x16xf32>
    %cst_4 = arith.constant 2.000000e+00 : f32
    %15 = vector.broadcast %cst_4 : f32 to vector<4x16x16xf32>
    %16 = arith.mulf %15, %1 : vector<4x16x16xf32>
    %17 = arith.subf %14, %16 : vector<4x16x16xf32>
    %cst_5 = arith.constant 0.000000e+00 : f32
    %18 = vector.broadcast %cst_5 : f32 to vector<4x16x16xf32>
    %19 = arith.maximumf %17, %18 : vector<4x16x16xf32>
    %cst_6 = arith.constant -0.111111112 : f32
    %20 = vector.broadcast %cst_6 : f32 to vector<4x16x16xf32>
    %21 = arith.mulf %19, %20 : vector<4x16x16xf32>
    %22 = math.exp %21 : vector<4x16x16xf32>
    %cst_7 = arith.constant 0xFF800000 : f32
    %23 = vector.broadcast %cst_7 : f32 to vector<4x16x16xf32>
    %24 = arith.select %4, %23, %22 : vector<4x16x16xi1>, vector<4x16x16xf32>
    %c0_i32 = arith.constant 0 : i32
    %cst_8 = arith.constant dense<0xFF800000> : vector<4x16xf32>
    %25 = vector.multi_reduction <maximumf>, %24, %cst_8 [2] : vector<4x16x16xf32> to vector<4x16xf32>
    %26 = vector.shape_cast %25 : vector<4x16xf32> to vector<4x16x1xf32>
    %27 = vector.broadcast %26 : vector<4x16x1xf32> to vector<4x16x16xf32>
    %28 = arith.cmpf oge, %24, %27 : vector<4x16x16xf32>
    %c16_i32 = arith.constant 16 : i32
    %29 = vector.broadcast %c16_i32 : i32 to vector<4x16x16xi32>
    %30 = arith.select %28, %3, %29 : vector<4x16x16xi1>, vector<4x16x16xi32>
    %cst_9 = arith.constant dense<2147483647> : vector<4x16xi32>
    %31 = vector.multi_reduction <minsi>, %30, %cst_9 [2] : vector<4x16x16xi32> to vector<4x16xi32>
    %32 = vector.shape_cast %31 : vector<4x16xi32> to vector<4x16x1xi32>
    %33 = vector.broadcast %32 : vector<4x16x1xi32> to vector<4x16x16xi32>
    %34 = arith.cmpi eq, %3, %33 : vector<4x16x16xi32>
    %35 = arith.extui %34 : vector<4x16x16xi1> to vector<4x16x16xi32>
    %36 = arith.sitofp %35 : vector<4x16x16xi32> to vector<4x16x16xf32>
    %37 = arith.addf %6, %36 : vector<4x16x16xf32>
    %cst_10 = arith.constant 0xFF800000 : f32
    %38 = vector.broadcast %cst_10 : f32 to vector<4x16x16xf32>
    %39 = arith.select %34, %38, %24 : vector<4x16x16xi1>, vector<4x16x16xf32>
    %c1_i32 = arith.constant 1 : i32
    %cst_11 = arith.constant dense<0xFF800000> : vector<4x16xf32>
    %40 = vector.multi_reduction <maximumf>, %39, %cst_11 [2] : vector<4x16x16xf32> to vector<4x16xf32>
    %41 = vector.shape_cast %40 : vector<4x16xf32> to vector<4x16x1xf32>
    %42 = vector.broadcast %41 : vector<4x16x1xf32> to vector<4x16x16xf32>
    %43 = arith.cmpf oge, %39, %42 : vector<4x16x16xf32>
    %c16_i32_12 = arith.constant 16 : i32
    %44 = vector.broadcast %c16_i32_12 : i32 to vector<4x16x16xi32>
    %45 = arith.select %43, %3, %44 : vector<4x16x16xi1>, vector<4x16x16xi32>
    %cst_13 = arith.constant dense<2147483647> : vector<4x16xi32>
    %46 = vector.multi_reduction <minsi>, %45, %cst_13 [2] : vector<4x16x16xi32> to vector<4x16xi32>
    %47 = vector.shape_cast %46 : vector<4x16xi32> to vector<4x16x1xi32>
    %48 = vector.broadcast %47 : vector<4x16x1xi32> to vector<4x16x16xi32>
    %49 = arith.cmpi eq, %3, %48 : vector<4x16x16xi32>
    %50 = arith.extui %49 : vector<4x16x16xi1> to vector<4x16x16xi32>
    %51 = arith.sitofp %50 : vector<4x16x16xi32> to vector<4x16x16xf32>
    %52 = arith.addf %37, %51 : vector<4x16x16xf32>
    %cst_14 = arith.constant 0xFF800000 : f32
    %53 = vector.broadcast %cst_14 : f32 to vector<4x16x16xf32>
    %54 = arith.select %49, %53, %39 : vector<4x16x16xi1>, vector<4x16x16xf32>
    %c2_i32 = arith.constant 2 : i32
    %cst_15 = arith.constant dense<0xFF800000> : vector<4x16xf32>
    %55 = vector.multi_reduction <maximumf>, %54, %cst_15 [2] : vector<4x16x16xf32> to vector<4x16xf32>
    %56 = vector.shape_cast %55 : vector<4x16xf32> to vector<4x16x1xf32>
    %57 = vector.broadcast %56 : vector<4x16x1xf32> to vector<4x16x16xf32>
    %58 = arith.cmpf oge, %54, %57 : vector<4x16x16xf32>
    %c16_i32_16 = arith.constant 16 : i32
    %59 = vector.broadcast %c16_i32_16 : i32 to vector<4x16x16xi32>
    %60 = arith.select %58, %3, %59 : vector<4x16x16xi1>, vector<4x16x16xi32>
    %cst_17 = arith.constant dense<2147483647> : vector<4x16xi32>
    %61 = vector.multi_reduction <minsi>, %60, %cst_17 [2] : vector<4x16x16xi32> to vector<4x16xi32>
    %62 = vector.shape_cast %61 : vector<4x16xi32> to vector<4x16x1xi32>
    %63 = vector.broadcast %62 : vector<4x16x1xi32> to vector<4x16x16xi32>
    %64 = arith.cmpi eq, %3, %63 : vector<4x16x16xi32>
    %65 = arith.extui %64 : vector<4x16x16xi1> to vector<4x16x16xi32>
    %66 = arith.sitofp %65 : vector<4x16x16xi32> to vector<4x16x16xf32>
    %67 = arith.addf %52, %66 : vector<4x16x16xf32>
    %cst_18 = arith.constant 0xFF800000 : f32
    %68 = vector.broadcast %cst_18 : f32 to vector<4x16x16xf32>
    %69 = arith.select %64, %68, %54 : vector<4x16x16xi1>, vector<4x16x16xf32>
    %70 = arith.subf %67, %6 : vector<4x16x16xf32>
    %71 = arith.mulf %70, %22 : vector<4x16x16xf32>
    %72 = arith.addf %6, %71 : vector<4x16x16xf32>
    %cst_19 = arith.constant dense<0.000000e+00> : vector<4x16xf32>
    %73 = vector.multi_reduction <add>, %72, %cst_19 [2] : vector<4x16x16xf32> to vector<4x16xf32>
    %74 = vector.shape_cast %73 : vector<4x16xf32> to vector<4x16x1xf32>
    %cst_20 = arith.constant 1.000000e+00 : f32
    %75 = vector.broadcast %cst_20 : f32 to vector<4x16x1xf32>
    %76 = arith.addf %74, %75 : vector<4x16x1xf32>
    %77 = math.rsqrt %76 : vector<4x16x1xf32>
    %78 = arith.mulf %77, %77 : vector<4x16x1xf32>
    %c0_21 = arith.constant 0 : index
    %79 = memref.load %arg4[%c0_21] : memref<3xf32, #tpu.memory_space<smem>>
    %c1 = arith.constant 1 : index
    %80 = memref.load %arg4[%c1] : memref<3xf32, #tpu.memory_space<smem>>
    %c2 = arith.constant 2 : index
    %81 = memref.load %arg4[%c2] : memref<3xf32, #tpu.memory_space<smem>>
    %82 = arith.truncf %72 : vector<4x16x16xf32> to vector<4x16x16xbf16>
    %83 = vector.broadcast %77 : vector<4x16x1xf32> to vector<4x16x64xf32>
    %84 = arith.mulf %0, %83 : vector<4x16x64xf32>
    %85 = arith.truncf %84 : vector<4x16x64xf32> to vector<4x16x64xbf16>
    "tpu.trace_start"() <{level = 10 : i32, message = "bij,bjd->bid"}> : () -> ()
    %cst_22 = arith.constant dense<0.000000e+00> : vector<4x16x64xf32>
    %86 = tpu.matmul %82, %85, %cst_22 {dimension_numbers = #tpu.dot_dimension_numbers<[2], [1], [1], [2], [0, 0, 0, 1, 1, 2], [0], [0]>} : vector<4x16x16xbf16>, vector<4x16x64xbf16>, vector<4x16x64xf32> -> vector<4x16x64xf32>
    "tpu.trace_stop"() : () -> ()
    %87 = vector.broadcast %77 : vector<4x16x1xf32> to vector<4x16x64xf32>
    %88 = arith.mulf %86, %87 : vector<4x16x64xf32>
    %89 = vector.broadcast %78 : vector<4x16x1xf32> to vector<4x16x64xf32>
    %90 = arith.mulf %86, %89 : vector<4x16x64xf32>
    %91 = arith.truncf %90 : vector<4x16x64xf32> to vector<4x16x64xbf16>
    "tpu.trace_start"() <{level = 10 : i32, message = "bij,bjd->bid"}> : () -> ()
    %cst_23 = arith.constant dense<0.000000e+00> : vector<4x16x64xf32>
    %92 = tpu.matmul %82, %91, %cst_23 {dimension_numbers = #tpu.dot_dimension_numbers<[2], [1], [1], [2], [0, 0, 0, 1, 1, 2], [0], [0]>} : vector<4x16x16xbf16>, vector<4x16x64xbf16>, vector<4x16x64xf32> -> vector<4x16x64xf32>
    "tpu.trace_stop"() : () -> ()
    %93 = vector.broadcast %77 : vector<4x16x1xf32> to vector<4x16x64xf32>
    %94 = arith.mulf %92, %93 : vector<4x16x64xf32>
    %95 = vector.broadcast %79 : f32 to vector<4x16x64xf32>
    %96 = arith.mulf %95, %0 : vector<4x16x64xf32>
    %97 = vector.broadcast %80 : f32 to vector<4x16x64xf32>
    %98 = arith.mulf %97, %88 : vector<4x16x64xf32>
    %99 = arith.addf %96, %98 : vector<4x16x64xf32>
    %100 = vector.broadcast %81 : f32 to vector<4x16x64xf32>
    %101 = arith.mulf %100, %94 : vector<4x16x64xf32>
    %102 = arith.addf %99, %101 : vector<4x16x64xf32>
    %103 = vector.shape_cast %102 : vector<4x16x64xf32> to vector<64x64xf32>
    %104 = arith.truncf %103 : vector<64x64xf32> to vector<64x64xbf16>
    %c0_24 = arith.constant 0 : index
    %c0_25 = arith.constant 0 : index
    %105 = vector.load %arg2[%c0_24, %c0_25] : memref<64x512xbf16, #tpu.memory_space<vmem>>, vector<64x512xbf16>
    %cst_26 = arith.constant dense<0.000000e+00> : vector<64x512xf32>
    %106 = tpu.matmul %104, %105, %cst_26 {dimension_numbers = #tpu.dot_dimension_numbers<[1], [0], [0], [1], [0, 0, 1, 1], [], []>} : vector<64x64xbf16>, vector<64x512xbf16>, vector<64x512xf32> -> vector<64x512xf32>
    %c0_27 = arith.constant 0 : index
    %c0_28 = arith.constant 0 : index
    %107 = vector.load %arg3[%c0_27, %c0_28] : memref<1x512xf32, #tpu.memory_space<vmem>>, vector<1x512xf32>
    %108 = vector.broadcast %107 : vector<1x512xf32> to vector<64x512xf32>
    %109 = arith.addf %106, %108 : vector<64x512xf32>
    %cst_29 = arith.constant 0.000000e+00 : f32
    %110 = vector.broadcast %cst_29 : f32 to vector<64x512xf32>
    %111 = arith.maximumf %109, %110 : vector<64x512xf32>
    %c0_30 = arith.constant 0 : index
    %c0_31 = arith.constant 0 : index
    %112 = vector.load %arg5[%c0_30, %c0_31] : memref<64x512xf32, #tpu.memory_space<vmem>>, vector<64x512xf32>
    tpu.vector_store %arg5[%c0_30, %c0_31], %111 {strides = array<i32>} : memref<64x512xf32, #tpu.memory_space<vmem>>, vector<64x512xf32>,
    return
  }
  func.func @transform_0(%arg0: i32) -> (i32, i32, i32) {
    %c0_i32 = arith.constant 0 : i32
    %c0_i32_0 = arith.constant 0 : i32
    %c0_i32_1 = arith.constant 0 : i32
    return %arg0, %c0_i32, %c0_i32_0 : i32, i32, i32
  }
  func.func @transform_1(%arg0: i32) -> (i32, i32) {
    %c0_i32 = arith.constant 0 : i32
    %c0_i32_0 = arith.constant 0 : i32
    %c0_i32_1 = arith.constant 0 : i32
    return %c0_i32, %c0_i32_0 : i32, i32
  }
  func.func @transform_2(%arg0: i32) -> (i32, i32) {
    %c0_i32 = arith.constant 0 : i32
    %c0_i32_0 = arith.constant 0 : i32
    %c0_i32_1 = arith.constant 0 : i32
    return %c0_i32, %c0_i32_0 : i32, i32
  }
  func.func @transform_3(%arg0: i32) -> i32 {
    %c0_i32 = arith.constant 0 : i32
    %c0_i32_0 = arith.constant 0 : i32
    return %c0_i32 : i32
  }
  func.func @transform_4(%arg0: i32) -> (i32, i32) {
    %c0_i32 = arith.constant 0 : i32
    %c0_i32_0 = arith.constant 0 : i32
    return %arg0, %c0_i32 : i32, i32
  }
}

</mosaic_0001>

<llo_original>
// kernel: tpu_custom_call.1
$region0: #{tpu_custom_call.1}
  #allocation0 [shape = 'u32[]', space=smem, size = 0x4, offset = 0x4, fixed_abs, tag = 'smem constant byte address 0x4 - core index']
  #allocation1 [shape = 'u32[144,128]{1,0:T(1,128)}', space=vmem, size = 0x12000, scoped, tag = 'internal scratch']
  %s0 = inlined_call_operand.hbm [shape: f32[8,16,64], index: 0, kind: input, shape index: {}]
  %s1 = inlined_call_operand.hbm [shape: bf16[64,512], index: 1, kind: input, shape index: {}]
  %s2 = inlined_call_operand.hbm [shape: f32[1,512], index: 2, kind: input, shape index: {}]
  %s3 = inlined_call_operand.vmem [shape: f32[3], index: 3, kind: input, shape index: {}]
  %s4 = inlined_call_operand.hbm [shape: f32[128,512], index: 4, kind: output, shape index: {}]
  %s5 = sld [smem:[#allocation0]]
  $region65: #{tpu_custom_call.1} parent=0
    _
  %s7 = ssub.s32 1, %s5
  %s8 = scalar_select 0, %s7, %s5
  $region1: #{tpu_custom_call.1} parent=0
    #allocation2 [shape = 'u8[65536]{0}', space=vmem, size = 0x10000, scoped, tag = 'input window, operand 0']
    #allocation3 [shape = 's32[2]{0}', space=sflag, size = 0x8, scoped, tag = 'scoped memory for tpu_custom_call.1']
    #allocation4 [shape = 's32[2]{0}', space=sflag, size = 0x8, scoped, tag = 'scoped memory for tpu_custom_call.1']
    #allocation5 [shape = 's32[2]{0}', space=sflag, size = 0x8, scoped, tag = 'scoped memory for tpu_custom_call.1']
    #allocation6 [shape = 'u8[65536]{0}', space=vmem, size = 0x10000, scoped, tag = 'input window, operand 1, single buffered']
    #allocation7 [shape = 's32[1]{0}', space=sflag, size = 0x4, scoped, tag = 'scoped memory for tpu_custom_call.1']
    #allocation8 [shape = 'u8[2048]{0}', space=vmem, size = 0x800, scoped, tag = 'input window, operand 2, single buffered']
    #allocation9 [shape = 'u8[512]{0}', space=smem, size = 0x200, scoped, tag = 'input window, operand 3, single buffered']
    #allocation10 [shape = 'u8[262144]{0}', space=vmem, size = 0x40000, scoped, tag = 'output window, operand 0']
    %9 = vsyncpa [#allocation3], 0
    %s10 = scalar_lea.sflag [#allocation3], 1
    %11 = vsyncpa %s10, 0
    %12 = vsyncpa [#allocation7], 0
    %13 = vsyncpa [#allocation5], 0
    %14 = vsyncpa [#allocation4], 0
    %s15 = scalar_lea.sflag [#allocation4], 1
    %16 = vsyncpa %s15, 0
    loop: start=0, step=1, limit=4
    $region2: #{tpu_custom_call.1} parent=1 // loop_pre_header
      _
    $region3: #{tpu_custom_call.1} parent=1 // loop_header
      %s18 = sphi 0, %s22
      %p19 = scmp.ge.s32.totalorder %s18, 4
      %s28 = sphi 0, %s30
      %s31 = sphi 0, %s28
      %s32 = sphi 0, %s31
      %s48 = sphi 0, %s32
      %s52 = sphi 0, %s52
      %s54 = sphi 0, %s52
      %s55 = sphi 0, %s54
      %s69 = sphi 0, %s55
      %s73 = sphi 0, %s73
      %s75 = sphi 0, %s73
      %s76 = sphi 0, %s75
      %s90 = sphi 0, %s76
      %s94 = sphi 0, %s94
      %s96 = sphi 0, %s94
      %s97 = sphi 0, %s96
      %s111 = sphi 0, %s97
      %s117 = sphi 0, %s119
      %s120 = sphi 0, %s117
      %s121 = sphi 0, %s120
      %s137 = sphi 0, %s121
    $region4: #{tpu_custom_call.1} parent=1 // loop_header_branch
      %21 = sbr.rel (%p19) target = $region8
    $region5: #{tpu_custom_call.1} parent=1 // loop_body
      %s23 = ssub.s32 %s18, 1
      %s24 = ssub.s32 %s18, 2
      %s25 = sadd.s32 %s18, 1
      %s26 = ssub.s32 %s18, %s25
      %p27 = scmp.eq.s32.totalorder %s26, 0
      %s29 = sadd.s32 %s28, 1
      %s30 = scalar_select %p27, %s28, %s29
      %p33 = pneg %p27
      %p34 = scmp.eq.s32.totalorder %s18, 1
      %p35 = por %p33, %p34
      %p36 = scmp.ne.s32.totalorder %s28, %s31
      %p37 = scmp.eq.s32.totalorder %s18, 0
      %p38 = por %p36, %p37
      %p39 = scmp.ne.s32.totalorder %s28, %s31
      %p40 = scmp.eq.s32.totalorder %s23, 1
      %p41 = por %p39, %p40
      %p42 = scmp.ne.s32.totalorder %s31, %s32
      %p43 = scmp.eq.s32.totalorder %s23, 0
      %p44 = por %p42, %p43
      %p45 = scmp.ne.s32.totalorder %s31, %s32
      %p46 = scmp.eq.s32.totalorder %s24, 1
      %p47 = por %p45, %p46
      %p49 = scmp.ne.s32.totalorder %s32, %s48
      %p50 = scmp.eq.s32.totalorder %s24, 0
      %p51 = por %p49, %p50
      %s53 = sadd.s32 %s52, 1
      %p56 = scmp.eq.s32.totalorder %s18, 1
      %p57 = scmp.ne.s32.totalorder %s52, %s54
      %p58 = scmp.eq.s32.totalorder %s18, 0
      %p59 = por %p57, %p58
      %p60 = scmp.ne.s32.totalorder %s52, %s54
      %p61 = scmp.eq.s32.totalorder %s23, 1
      %p62 = por %p60, %p61
      %p63 = scmp.ne.s32.totalorder %s54, %s55
      %p64 = scmp.eq.s32.totalorder %s23, 0
      %p65 = por %p63, %p64
      %p66 = scmp.ne.s32.totalorder %s54, %s55
      %p67 = scmp.eq.s32.totalorder %s24, 1
      %p68 = por %p66, %p67
      %p70 = scmp.ne.s32.totalorder %s55, %s69
      %p71 = scmp.eq.s32.totalorder %s24, 0
      %p72 = por %p70, %p71
      %s74 = sadd.s32 %s73, 1
      %p77 = scmp.eq.s32.totalorder %s18, 1
      %p78 = scmp.ne.s32.totalorder %s73, %s75
      %p79 = scmp.eq.s32.totalorder %s18, 0
      %p80 = por %p78, %p79
      %p81 = scmp.ne.s32.totalorder %s73, %s75
      %p82 = scmp.eq.s32.totalorder %s23, 1
      %p83 = por %p81, %p82
      %p84 = scmp.ne.s32.totalorder %s75, %s76
      %p85 = scmp.eq.s32.totalorder %s23, 0
      %p86 = por %p84, %p85
      %p87 = scmp.ne.s32.totalorder %s75, %s76
      %p88 = scmp.eq.s32.totalorder %s24, 1
      %p89 = por %p87, %p88
      %p91 = scmp.ne.s32.totalorder %s76, %s90
      %p92 = scmp.eq.s32.totalorder %s24, 0
      %p93 = por %p91, %p92
      %s95 = sadd.s32 %s94, 1
      %p98 = scmp.eq.s32.totalorder %s18, 1
      %p99 = scmp.ne.s32.totalorder %s94, %s96
      %p100 = scmp.eq.s32.totalorder %s18, 0
      %p101 = por %p99, %p100
      %p102 = scmp.ne.s32.totalorder %s94, %s96
      %p103 = scmp.eq.s32.totalorder %s23, 1
      %p104 = por %p102, %p103
      %p105 = scmp.ne.s32.totalorder %s96, %s97
      %p106 = scmp.eq.s32.totalorder %s23, 0
      %p107 = por %p105, %p106
      %p108 = scmp.ne.s32.totalorder %s96, %s97
      %p109 = scmp.eq.s32.totalorder %s24, 1
      %p110 = por %p108, %p109
      %p112 = scmp.ne.s32.totalorder %s97, %s111
      %p113 = scmp.eq.s32.totalorder %s24, 0
      %p114 = por %p112, %p113
      %s115 = ssub.s32 %s18, %s25
      %p116 = scmp.eq.s32.totalorder %s115, 0
      %s118 = sadd.s32 %s117, 1
      %s119 = scalar_select %p116, %s117, %s118
      %p122 = pneg %p116
      %p123 = scmp.eq.s32.totalorder %s18, 1
      %p124 = por %p122, %p123
      %p125 = scmp.ne.s32.totalorder %s117, %s120
      %p126 = scmp.eq.s32.totalorder %s18, 0
      %p127 = por %p125, %p126
      %p128 = scmp.ne.s32.totalorder %s117, %s120
      %p129 = scmp.eq.s32.totalorder %s23, 1
      %p130 = por %p128, %p129
      %p131 = scmp.ne.s32.totalorder %s120, %s121
      %p132 = scmp.eq.s32.totalorder %s23, 0
      %p133 = por %p131, %p132
      %p134 = scmp.ne.s32.totalorder %s120, %s121
      %p135 = scmp.eq.s32.totalorder %s24, 1
      %p136 = por %p134, %p135
      %p138 = scmp.ne.s32.totalorder %s121, %s137
      %p139 = scmp.eq.s32.totalorder %s24, 0
      %p140 = por %p138, %p139
      %p141 = scmp.le.s32.totalorder 1, %s18
      %p142 = scmp.lt.s32.totalorder %s18, 3
      %p143 = pnand %p141, %p142
      %p144 = pneg %p143
      // Predicated region
      $region9: #{tpu_custom_call.1} parent=5 // pred_check
        _
      $region10: #{tpu_custom_call.1} parent=5 // pred_check_branch
        %146 = sbr.rel (%p143) target = $region12
      $region11: #{tpu_custom_call.1} parent=5 // pred_region
        %s147 = ssub.s32 %s18, 1
        // Predicated region
        $region13: #{tpu_custom_call.1} parent=11 // pred_check
          %p148 = pneg %p65
        $region14: #{tpu_custom_call.1} parent=11 // pred_check_branch
          %150 = sbr.rel (%p148) target = $region16
        $region15: #{tpu_custom_call.1} parent=11 // pred_region
          %s152 = ssub.s32 2048, 2048
          %153 = vsyncadd [#allocation7], %s152
          %s154 = sshll.u32 [#allocation6], 4
          %s155 = int_to_ptr.vmem [resolvable:$true] %s154
          %160 = dma.hbm_to_vmem [thread:$0]  %s1, 2048, %s155, [#allocation7], 256, 256, 16
        $region16: #{tpu_custom_call.1} parent=11 // pred_fallthru
          _
        // Predicated region
        $region17: #{tpu_custom_call.1} parent=11 // pred_check
          %p161 = pneg %p86
        $region18: #{tpu_custom_call.1} parent=11 // pred_check_branch
          %163 = sbr.rel (%p161) target = $region20
        $region19: #{tpu_custom_call.1} parent=11 // pred_region
          %s165 = ssub.s32 64, 64
          %166 = vsyncadd [#allocation7], %s165
          %s168 = sshll.u32 [#allocation8], 4
          %s169 = int_to_ptr.vmem [resolvable:$true] %s168
          %171 = dma.hbm_to_vmem [thread:$0]  %s2, 64, %s169, [#allocation7]
        $region20: #{tpu_custom_call.1} parent=11 // pred_fallthru
          _
        // Predicated region
        $region21: #{tpu_custom_call.1} parent=11 // pred_check
          %p172 = pneg %p107
        $region22: #{tpu_custom_call.1} parent=11 // pred_check_branch
          %174 = sbr.rel (%p172) target = $region24
        $region23: #{tpu_custom_call.1} parent=11 // pred_region
          %s176 = ssub.s32 16, 16
          %177 = vsyncadd [#allocation5], %s176
          %s179 = sshll.u32 %s3, 4
          %s180 = int_to_ptr.vmem [resolvable:$true] %s179
          %182 = dma.vmem_to_smem %s180, 16, [#allocation9], [#allocation5]
        $region24: #{tpu_custom_call.1} parent=11 // pred_fallthru
          _
      $region12: #{tpu_custom_call.1} parent=5 // pred_fallthru
        _
      %p183 = scmp.lt.s32.totalorder %s18, 2
      // Predicated region
      $region25: #{tpu_custom_call.1} parent=5 // pred_check
        %p184 = pneg %p183
      $region26: #{tpu_custom_call.1} parent=5 // pred_check_branch
        %186 = sbr.rel (%p184) target = $region28
      $region27: #{tpu_custom_call.1} parent=5 // pred_region
        // Predicated region
        $region29: #{tpu_custom_call.1} parent=27 // pred_check
          %p187 = pneg %p38
        $region30: #{tpu_custom_call.1} parent=27 // pred_check_branch
          %189 = sbr.rel (%p187) target = $region32
        $region31: #{tpu_custom_call.1} parent=27 // pred_region
          %s190 = sand.u32 %s28, 1
          %s191 = scalar_lea.sflag [#allocation3], %s190
          %s192 = sand.u32 %s28, 1
          %s193 = smul.addr %s192, 64
          %s194 = scalar_lea.vmem [#allocation2], %s193
          %s195 = smul.u32 4, %s18
          %s197 = ssub.s32 1024, 1024
          %198 = vsyncadd %s191, %s197
          %s199 = smul.addr %s195, 2
          %s200 = smul.addr %s199, 128
          %s201 = scalar_lea.hbm %s0, %s200
          %s202 = sshll.u32 %s194, 4
          %s203 = int_to_ptr.vmem [resolvable:$true] %s202
          %208 = dma.hbm_to_vmem [thread:$0]  %s201, 1024, %s203, %s191, 128, 128, 8
        $region32: #{tpu_custom_call.1} parent=27 // pred_fallthru
          _
      $region28: #{tpu_custom_call.1} parent=5 // pred_fallthru
        _
      %p209 = scmp.le.s32.totalorder 1, %s18
      %p210 = scmp.lt.s32.totalorder %s18, 3
      %p211 = pnand %p209, %p210
      %p212 = pneg %p211
      // Predicated region
      $region33: #{tpu_custom_call.1} parent=5 // pred_check
        _
      $region34: #{tpu_custom_call.1} parent=5 // pred_check_branch
        %214 = sbr.rel (%p211) target = $region36
      $region35: #{tpu_custom_call.1} parent=5 // pred_region
        %s215 = ssub.s32 %s18, 1
        %s216 = sand.u32 %s31, 1
        %s217 = scalar_lea.sflag [#allocation3], %s216
        %s218 = sand.u32 %s31, 1
        %s219 = smul.addr %s218, 64
        %s220 = scalar_lea.vmem [#allocation2], %s219
        // Predicated region
        $region37: #{tpu_custom_call.1} parent=35 // pred_check
          %p221 = pneg %p44
        $region38: #{tpu_custom_call.1} parent=35 // pred_check_branch
          %223 = sbr.rel (%p221) target = $region40
        $region39: #{tpu_custom_call.1} parent=35 // pred_region
          %224 = dma.done %s217, 1024
        $region40: #{tpu_custom_call.1} parent=35 // pred_fallthru
          _
        // Predicated region
        $region41: #{tpu_custom_call.1} parent=35 // pred_check
          %p225 = pneg %p65
        $region42: #{tpu_custom_call.1} parent=35 // pred_check_branch
          %227 = sbr.rel (%p225) target = $region44
        $region43: #{tpu_custom_call.1} parent=35 // pred_region
          %228 = dma.done [#allocation7], 2048
        $region44: #{tpu_custom_call.1} parent=35 // pred_fallthru
          _
        // Predicated region
        $region45: #{tpu_custom_call.1} parent=35 // pred_check
          %p229 = pneg %p86
        $region46: #{tpu_custom_call.1} parent=35 // pred_check_branch
          %231 = sbr.rel (%p229) target = $region48
        $region47: #{tpu_custom_call.1} parent=35 // pred_region
          %232 = dma.done [#allocation7], 64
        $region48: #{tpu_custom_call.1} parent=35 // pred_fallthru
          _
        // Predicated region
        $region49: #{tpu_custom_call.1} parent=35 // pred_check
          %p233 = pneg %p107
        $region50: #{tpu_custom_call.1} parent=35 // pred_check_branch
          %235 = sbr.rel (%p233) target = $region52
        $region51: #{tpu_custom_call.1} parent=35 // pred_region
          %236 = dma.done [#allocation5], 16
        $region52: #{tpu_custom_call.1} parent=35 // pred_fallthru
          _
        %237 = sfence
        %s238 = sand.u32 %s31, 1
        %s239 = scalar_lea.sflag [#allocation3], %s238
        %s240 = sand.u32 %s31, 1
        %s241 = smul.addr %s240, 64
        %s242 = scalar_lea.vmem [#allocation2], %s241
        %p243 = pneg %p44
        %p244 = pneg %p41
        %p245 = pneg %p65
        %p246 = pneg %p62
        %p247 = pneg %p86
        %p248 = pneg %p83
        %p249 = pneg %p107
        %p250 = pneg %p104
        %p251 = pneg %p133
        %p252 = pneg %p130
        %s253 = sand.u32 %s120, 1
        %s254 = scalar_lea.sflag [#allocation4], %s253
        %s255 = sand.u32 %s120, 1
        %s256 = smul.addr %s255, 256
        %s257 = scalar_lea.vmem [#allocation10], %s256
        %s258 = smul.u32 4, %s23
        %s259 = smul.u32 8, %s23
        %v261 = vld [vmem:[%s220] sm:$0xff]
        %v262 = vld [vmem:[%s220 + $0x8] sm:$0xff]
        %v263 = vld [vmem:[%s220 + $0x10] sm:$0xff]
        %v264 = vld [vmem:[%s220 + $0x18] sm:$0xff]
        %v265 = vld [vmem:[%s220 + $0x20] sm:$0xff]
        %v266 = vld [vmem:[%s220 + $0x28] sm:$0xff]
        %v267 = vld [vmem:[%s220 + $0x30] sm:$0xff]
        %v268 = vld [vmem:[%s220 + $0x38] sm:$0xff]
        %vm269 = vcmask 523264
        %v271 = vsel %vm269, %v261, 0
        %v274 = vsel %vm269, %v262, 0
        %276 = vmatprep.subr.mxu0 0.0
        %277 = vmatpush1.xpose.msra.mxu0 0.0
        %278 = vmatprep.subr.mxu0 0.0
        %279 = vmatpush1.xpose.msra.mxu0 0.0
        %280 = vmatprep.subr.mxu0 0.0
        %281 = vmatpush1.xpose.msra.mxu0 0.0
        %282 = vmatprep.subr.mxu0 0.0
        %283 = vmatpush1.xpose.msra.mxu0 0.0
        %284 = vmatprep.subr.mxu0 0.0
        %285 = vmatpush1.xpose.msra.mxu0 0.0
        %286 = vmatprep.subr.mxu0 0.0
        %287 = vmatpush1.xpose.msra.mxu0 0.0
        %288 = vmatprep.subr.mxu0 0.0
        %289 = vmatpush1.xpose.msra.mxu0 0.0
        %290 = vmatprep.subr.mxu0 0.0
        %291 = vmatpush1.xpose.msra.mxu0 0.0
        %292 = vmatprep.subr.mxu0 0.0
        %293 = vmatpush1.xpose.msra.mxu0 0.0
        %294 = vmatprep.subr.mxu0 0.0
        %295 = vmatpush1.xpose.msra.mxu0 0.0
        %296 = vmatprep.subr.mxu0 0.0
        %297 = vmatpush1.xpose.msra.mxu0 0.0
        %298 = vmatprep.subr.mxu0 0.0
        %299 = vmatpush1.xpose.msra.mxu0 0.0
        %300 = vmatprep.subr.mxu0 0.0
        %301 = vmatpush1.xpose.msra.mxu0 0.0
        %302 = vmatprep.subr.mxu0 0.0
        %303 = vmatpush1.xpose.msra.mxu0 0.0
        %304 = vmatprep.subr.mxu0 0.0
        %305 = vmatpush1.xpose.msra.mxu0 %v274
        %306 = vmatprep.subr.mxu0 0.0
        %307 = vmatpush1.xpose.msra.mxu0 %v271
        %308 = vmatprep.subr.mxu0 0.0
        %309 = vmatpush2.xpose.msra.mxu0 0.0
        %310 = vmatprep.subr.mxu0 0.0
        %311 = vmatpush2.xpose.msra.mxu0 0.0
        %312 = vmatprep.subr.mxu0 0.0
        %313 = vmatpush2.xpose.msra.mxu0 0.0
        %314 = vmatprep.subr.mxu0 0.0
        %315 = vmatpush2.xpose.msra.mxu0 0.0
        %316 = vmatprep.subr.mxu0 0.0
        %317 = vmatpush2.xpose.msra.mxu0 0.0
        %318 = vmatprep.subr.mxu0 0.0
        %319 = vmatpush2.xpose.msra.mxu0 0.0
        %320 = vmatprep.subr.mxu0 0.0
        %321 = vmatpush2.xpose.msra.mxu0 0.0
        %322 = vmatprep.subr.mxu0 0.0
        %323 = vmatpush2.xpose.msra.mxu0 0.0
        %324 = vmatprep.subr.mxu0 0.0
        %325 = vmatpush2.xpose.msra.mxu0 0.0
        %326 = vmatprep.subr.mxu0 0.0
        %327 = vmatpush2.xpose.msra.mxu0 0.0
        %328 = vmatprep.subr.mxu0 0.0
        %329 = vmatpush2.xpose.msra.mxu0 0.0
        %330 = vmatprep.subr.mxu0 0.0
        %331 = vmatpush2.xpose.msra.mxu0 0.0
        %332 = vmatprep.subr.mxu0 0.0
        %333 = vmatpush2.xpose.msra.mxu0 0.0
        %334 = vmatprep.subr.mxu0 0.0
        %335 = vmatpush2.xpose.msra.mxu0 0.0
        %336 = vmatprep.subr.mxu0 0.0
        %337 = vmatpush2.xpose.msra.mxu0 0.0
        %338 = vmatprep.subr.mxu0 0.0
        %339 = vmatpush2.xpose.msra.mxu0 0.0
        %340 = vmatprep.mubr.f32.mxu0 0.0
        %341 = vmatmul.mubr.f32.gmra.mxu0 %v271
        %v342 = vpop.f32.mrf.mxu0
        %v343 = vadd.f32 0.0, %v342
        %v344 = vpop.f32.mrf.mxu0
        %345 = vmatprep.mubr.f32.mxu0 0.0
        %346 = vmatmul.mubr.f32.gmra.mxu0 %v274
        %v347 = vpop.f32.mrf.mxu0
        %v348 = vadd.f32 0.0, %v347
        %v349 = vpop.f32.mrf.mxu0
        %350 = vdwg.mxu0
        %v352 = vsel %vm269, %v263, 0
        %v355 = vsel %vm269, %v264, 0
        %357 = vmatprep.subr.mxu0 0.0
        %358 = vmatpush1.xpose.msra.mxu0 0.0
        %359 = vmatprep.subr.mxu0 0.0
        %360 = vmatpush1.xpose.msra.mxu0 0.0
        %361 = vmatprep.subr.mxu0 0.0
        %362 = vmatpush1.xpose.msra.mxu0 0.0
        %363 = vmatprep.subr.mxu0 0.0
        %364 = vmatpush1.xpose.msra.mxu0 0.0
        %365 = vmatprep.subr.mxu0 0.0
        %366 = vmatpush1.xpose.msra.mxu0 0.0
        %367 = vmatprep.subr.mxu0 0.0
        %368 = vmatpush1.xpose.msra.mxu0 0.0
        %369 = vmatprep.subr.mxu0 0.0
        %370 = vmatpush1.xpose.msra.mxu0 0.0
        %371 = vmatprep.subr.mxu0 0.0
        %372 = vmatpush1.xpose.msra.mxu0 0.0
        %373 = vmatprep.subr.mxu0 0.0
        %374 = vmatpush1.xpose.msra.mxu0 0.0
        %375 = vmatprep.subr.mxu0 0.0
        %376 = vmatpush1.xpose.msra.mxu0 0.0
        %377 = vmatprep.subr.mxu0 0.0
        %378 = vmatpush1.xpose.msra.mxu0 0.0
        %379 = vmatprep.subr.mxu0 0.0
        %380 = vmatpush1.xpose.msra.mxu0 0.0
        %381 = vmatprep.subr.mxu0 0.0
        %382 = vmatpush1.xpose.msra.mxu0 0.0
        %383 = vmatprep.subr.mxu0 0.0
        %384 = vmatpush1.xpose.msra.mxu0 0.0
        %385 = vmatprep.subr.mxu0 0.0
        %386 = vmatpush1.xpose.msra.mxu0 %v355
        %387 = vmatprep.subr.mxu0 0.0
        %388 = vmatpush1.xpose.msra.mxu0 %v352
        %389 = vmatprep.subr.mxu0 0.0
        %390 = vmatpush2.xpose.msra.mxu0 0.0
        %391 = vmatprep.subr.mxu0 0.0
        %392 = vmatpush2.xpose.msra.mxu0 0.0
        %393 = vmatprep.subr.mxu0 0.0
        %394 = vmatpush2.xpose.msra.mxu0 0.0
        %395 = vmatprep.subr.mxu0 0.0
        %396 = vmatpush2.xpose.msra.mxu0 0.0
        %397 = vmatprep.subr.mxu0 0.0
        %398 = vmatpush2.xpose.msra.mxu0 0.0
        %399 = vmatprep.subr.mxu0 0.0
        %400 = vmatpush2.xpose.msra.mxu0 0.0
        %401 = vmatprep.subr.mxu0 0.0
        %402 = vmatpush2.xpose.msra.mxu0 0.0
        %403 = vmatprep.subr.mxu0 0.0
        %404 = vmatpush2.xpose.msra.mxu0 0.0
        %405 = vmatprep.subr.mxu0 0.0
        %406 = vmatpush2.xpose.msra.mxu0 0.0
        %407 = vmatprep.subr.mxu0 0.0
        %408 = vmatpush2.xpose.msra.mxu0 0.0
        %409 = vmatprep.subr.mxu0 0.0
        %410 = vmatpush2.xpose.msra.mxu0 0.0
        %411 = vmatprep.subr.mxu0 0.0
        %412 = vmatpush2.xpose.msra.mxu0 0.0
        %413 = vmatprep.subr.mxu0 0.0
        %414 = vmatpush2.xpose.msra.mxu0 0.0
        %415 = vmatprep.subr.mxu0 0.0
        %416 = vmatpush2.xpose.msra.mxu0 0.0
        %417 = vmatprep.subr.mxu0 0.0
        %418 = vmatpush2.xpose.msra.mxu0 0.0
        %419 = vmatprep.subr.mxu0 0.0
        %420 = vmatpush2.xpose.msra.mxu0 0.0
        %421 = vmatprep.mubr.f32.mxu0 0.0
        %422 = vmatmul.mubr.f32.gmra.mxu0 %v352
        %v423 = vpop.f32.mrf.mxu0
        %v424 = vadd.f32 0.0, %v423
        %v425 = vpop.f32.mrf.mxu0
        %426 = vmatprep.mubr.f32.mxu0 0.0
        %427 = vmatmul.mubr.f32.gmra.mxu0 %v355
        %v428 = vpop.f32.mrf.mxu0
        %v429 = vadd.f32 0.0, %v428
        %v430 = vpop.f32.mrf.mxu0
        %431 = vdwg.mxu0
        %v433 = vsel %vm269, %v265, 0
        %v436 = vsel %vm269, %v266, 0
        %438 = vmatprep.subr.mxu0 0.0
        %439 = vmatpush1.xpose.msra.mxu0 0.0
        %440 = vmatprep.subr.mxu0 0.0
        %441 = vmatpush1.xpose.msra.mxu0 0.0
        %442 = vmatprep.subr.mxu0 0.0
        %443 = vmatpush1.xpose.msra.mxu0 0.0
        %444 = vmatprep.subr.mxu0 0.0
        %445 = vmatpush1.xpose.msra.mxu0 0.0
        %446 = vmatprep.subr.mxu0 0.0
        %447 = vmatpush1.xpose.msra.mxu0 0.0
        %448 = vmatprep.subr.mxu0 0.0
        %449 = vmatpush1.xpose.msra.mxu0 0.0
        %450 = vmatprep.subr.mxu0 0.0
        %451 = vmatpush1.xpose.msra.mxu0 0.0
        %452 = vmatprep.subr.mxu0 0.0
        %453 = vmatpush1.xpose.msra.mxu0 0.0
        %454 = vmatprep.subr.mxu0 0.0
        %455 = vmatpush1.xpose.msra.mxu0 0.0
        %456 = vmatprep.subr.mxu0 0.0
        %457 = vmatpush1.xpose.msra.mxu0 0.0
        %458 = vmatprep.subr.mxu0 0.0
        %459 = vmatpush1.xpose.msra.mxu0 0.0
        %460 = vmatprep.subr.mxu0 0.0
        %461 = vmatpush1.xpose.msra.mxu0 0.0
        %462 = vmatprep.subr.mxu0 0.0
        %463 = vmatpush1.xpose.msra.mxu0 0.0
        %464 = vmatprep.subr.mxu0 0.0
        %465 = vmatpush1.xpose.msra.mxu0 0.0
        %466 = vmatprep.subr.mxu0 0.0
        %467 = vmatpush1.xpose.msra.mxu0 %v436
        %468 = vmatprep.subr.mxu0 0.0
        %469 = vmatpush1.xpose.msra.mxu0 %v433
        %470 = vmatprep.subr.mxu0 0.0
        %471 = vmatpush2.xpose.msra.mxu0 0.0
        %472 = vmatprep.subr.mxu0 0.0
        %473 = vmatpush2.xpose.msra.mxu0 0.0
        %474 = vmatprep.subr.mxu0 0.0
        %475 = vmatpush2.xpose.msra.mxu0 0.0
        %476 = vmatprep.subr.mxu0 0.0
        %477 = vmatpush2.xpose.msra.mxu0 0.0
        %478 = vmatprep.subr.mxu0 0.0
        %479 = vmatpush2.xpose.msra.mxu0 0.0
        %480 = vmatprep.subr.mxu0 0.0
        %481 = vmatpush2.xpose.msra.mxu0 0.0
        %482 = vmatprep.subr.mxu0 0.0
        %483 = vmatpush2.xpose.msra.mxu0 0.0
        %484 = vmatprep.subr.mxu0 0.0
        %485 = vmatpush2.xpose.msra.mxu0 0.0
        %486 = vmatprep.subr.mxu0 0.0
        %487 = vmatpush2.xpose.msra.mxu0 0.0
        %488 = vmatprep.subr.mxu0 0.0
        %489 = vmatpush2.xpose.msra.mxu0 0.0
        %490 = vmatprep.subr.mxu0 0.0
        %491 = vmatpush2.xpose.msra.mxu0 0.0
        %492 = vmatprep.subr.mxu0 0.0
        %493 = vmatpush2.xpose.msra.mxu0 0.0
        %494 = vmatprep.subr.mxu0 0.0
        %495 = vmatpush2.xpose.msra.mxu0 0.0
        %496 = vmatprep.subr.mxu0 0.0
        %497 = vmatpush2.xpose.msra.mxu0 0.0
        %498 = vmatprep.subr.mxu0 0.0
        %499 = vmatpush2.xpose.msra.mxu0 0.0
        %500 = vmatprep.subr.mxu0 0.0
        %501 = vmatpush2.xpose.msra.mxu0 0.0
        %502 = vmatprep.mubr.f32.mxu0 0.0
        %503 = vmatmul.mubr.f32.gmra.mxu0 %v433
        %v504 = vpop.f32.mrf.mxu0
        %v505 = vadd.f32 0.0, %v504
        %v506 = vpop.f32.mrf.mxu0
        %507 = vmatprep.mubr.f32.mxu0 0.0
        %508 = vmatmul.mubr.f32.gmra.mxu0 %v436
        %v509 = vpop.f32.mrf.mxu0
        %v510 = vadd.f32 0.0, %v509
        %v511 = vpop.f32.mrf.mxu0
        %512 = vdwg.mxu0
        %v514 = vsel %vm269, %v267, 0
        %v517 = vsel %vm269, %v268, 0
        %519 = vmatprep.subr.mxu0 0.0
        %520 = vmatpush1.xpose.msra.mxu0 0.0
        %521 = vmatprep.subr.mxu0 0.0
        %522 = vmatpush1.xpose.msra.mxu0 0.0
        %523 = vmatprep.subr.mxu0 0.0
        %524 = vmatpush1.xpose.msra.mxu0 0.0
        %525 = vmatprep.subr.mxu0 0.0
        %526 = vmatpush1.xpose.msra.mxu0 0.0
        %527 = vmatprep.subr.mxu0 0.0
        %528 = vmatpush1.xpose.msra.mxu0 0.0
        %529 = vmatprep.subr.mxu0 0.0
        %530 = vmatpush1.xpose.msra.mxu0 0.0
        %531 = vmatprep.subr.mxu0 0.0
        %532 = vmatpush1.xpose.msra.mxu0 0.0
        %533 = vmatprep.subr.mxu0 0.0
        %534 = vmatpush1.xpose.msra.mxu0 0.0
        %535 = vmatprep.subr.mxu0 0.0
        %536 = vmatpush1.xpose.msra.mxu0 0.0
        %537 = vmatprep.subr.mxu0 0.0
        %538 = vmatpush1.xpose.msra.mxu0 0.0
        %539 = vmatprep.subr.mxu0 0.0
        %540 = vmatpush1.xpose.msra.mxu0 0.0
        %541 = vmatprep.subr.mxu0 0.0
        %542 = vmatpush1.xpose.msra.mxu0 0.0
        %543 = vmatprep.subr.mxu0 0.0
        %544 = vmatpush1.xpose.msra.mxu0 0.0
        %545 = vmatprep.subr.mxu0 0.0
        %546 = vmatpush1.xpose.msra.mxu0 0.0
        %547 = vmatprep.subr.mxu0 0.0
        %548 = vmatpush1.xpose.msra.mxu0 %v517
        %549 = vmatprep.subr.mxu0 0.0
        %550 = vmatpush1.xpose.msra.mxu0 %v514
        %551 = vmatprep.subr.mxu0 0.0
        %552 = vmatpush2.xpose.msra.mxu0 0.0
        %553 = vmatprep.subr.mxu0 0.0
        %554 = vmatpush2.xpose.msra.mxu0 0.0
        %555 = vmatprep.subr.mxu0 0.0
        %556 = vmatpush2.xpose.msra.mxu0 0.0
        %557 = vmatprep.subr.mxu0 0.0
        %558 = vmatpush2.xpose.msra.mxu0 0.0
        %559 = vmatprep.subr.mxu0 0.0
        %560 = vmatpush2.xpose.msra.mxu0 0.0
        %561 = vmatprep.subr.mxu0 0.0
        %562 = vmatpush2.xpose.msra.mxu0 0.0
        %563 = vmatprep.subr.mxu0 0.0
        %564 = vmatpush2.xpose.msra.mxu0 0.0
        %565 = vmatprep.subr.mxu0 0.0
        %566 = vmatpush2.xpose.msra.mxu0 0.0
        %567 = vmatprep.subr.mxu0 0.0
        %568 = vmatpush2.xpose.msra.mxu0 0.0
        %569 = vmatprep.subr.mxu0 0.0
        %570 = vmatpush2.xpose.msra.mxu0 0.0
        %571 = vmatprep.subr.mxu0 0.0
        %572 = vmatpush2.xpose.msra.mxu0 0.0
        %573 = vmatprep.subr.mxu0 0.0
        %574 = vmatpush2.xpose.msra.mxu0 0.0
        %575 = vmatprep.subr.mxu0 0.0
        %576 = vmatpush2.xpose.msra.mxu0 0.0
        %577 = vmatprep.subr.mxu0 0.0
        %578 = vmatpush2.xpose.msra.mxu0 0.0
        %579 = vmatprep.subr.mxu0 0.0
        %580 = vmatpush2.xpose.msra.mxu0 0.0
        %581 = vmatprep.subr.mxu0 0.0
        %582 = vmatpush2.xpose.msra.mxu0 0.0
        %583 = vmatprep.mubr.f32.mxu0 0.0
        %584 = vmatmul.mubr.f32.gmra.mxu0 %v514
        %v585 = vpop.f32.mrf.mxu0
        %v586 = vadd.f32 0.0, %v585
        %v587 = vpop.f32.mrf.mxu0
        %588 = vmatprep.mubr.f32.mxu0 0.0
        %589 = vmatmul.mubr.f32.gmra.mxu0 %v517
        %v590 = vpop.f32.mrf.mxu0
        %v591 = vadd.f32 0.0, %v590
        %v592 = vpop.f32.mrf.mxu0
        %593 = vdwg.mxu0
        %v594 = vlaneseq
        %v595 = vshrl.u32 %v594, 7
        %v596 = vadd.s32 %v595, 8
        %v597 = vlaneseq
        %v598 = vand.u32 %v597, 127
        %vm599 = vcmp.eq.s32.totalorder %v595, %v598
        %vm600 = vcmp.eq.s32.totalorder %v596, %v598
        %v601 = vsel %vm599, 1, 0
        %v602 = vsel %vm600, 1, 0
        %v603 = vcvt.s32.f32 %v601
        %v604 = vcvt.s32.f32 %v602
        %v605 = vmul.f32 %v343, %v603
        %v606 = vmul.f32 %v348, %v604
        %v607 = vmul.f32 %v424, %v603
        %v608 = vmul.f32 %v429, %v604
        %v609 = vmul.f32 %v505, %v603
        %v610 = vmul.f32 %v510, %v604
        %v611 = vmul.f32 %v586, %v603
        %v612 = vmul.f32 %v591, %v604
        %vm613 = vcmask 130048
        %v614 = vsel %vm613, %v605, 0.0
        %615 = vadd.xlane.f32.xlu0 %v614
        %v616 = vpop.xlane.xlu0 %615
        %v617 = vsel %vm613, %v606, 0.0
        %618 = vadd.xlane.f32.xlu0 %v617
        %v619 = vpop.xlane.xlu0 %618
        %v620 = vsel %vm613, %v607, 0.0
        %621 = vadd.xlane.f32.xlu0 %v620
        %v622 = vpop.xlane.xlu0 %621
        %v623 = vsel %vm613, %v608, 0.0
        %624 = vadd.xlane.f32.xlu0 %v623
        %v625 = vpop.xlane.xlu0 %624
        %v626 = vsel %vm613, %v609, 0.0
        %627 = vadd.xlane.f32.xlu0 %v626
        %v628 = vpop.xlane.xlu0 %627
        %v629 = vsel %vm613, %v610, 0.0
        %630 = vadd.xlane.f32.xlu0 %v629
        %v631 = vpop.xlane.xlu0 %630
        %v632 = vsel %vm613, %v611, 0.0
        %633 = vadd.xlane.f32.xlu0 %v632
        %v634 = vpop.xlane.xlu0 %633
        %v635 = vsel %vm613, %v612, 0.0
        %636 = vadd.xlane.f32.xlu0 %v635
        %v637 = vpop.xlane.xlu0 %636
        %v638 = vadd.f32 %v614, %v617
        %v639 = vrot.slane %v638, 4
        %v640 = vadd.f32 %v638, %v639
        %v641 = vrot.slane %v640, 2
        %v642 = vadd.f32 %v640, %v641
        %v643 = vrot.slane %v642, 1
        %v644 = vadd.f32 %v642, %v643
        %v645 = vadd.f32 %v620, %v623
        %v646 = vrot.slane %v645, 4
        %v647 = vadd.f32 %v645, %v646
        %v648 = vrot.slane %v647, 2
        %v649 = vadd.f32 %v647, %v648
        %v650 = vrot.slane %v649, 1
        %v651 = vadd.f32 %v649, %v650
        %v652 = vadd.f32 %v626, %v629
        %v653 = vrot.slane %v652, 4
        %v654 = vadd.f32 %v652, %v653
        %v655 = vrot.slane %v654, 2
        %v656 = vadd.f32 %v654, %v655
        %v657 = vrot.slane %v656, 1
        %v658 = vadd.f32 %v656, %v657
        %v659 = vadd.f32 %v632, %v635
        %v660 = vrot.slane %v659, 4
        %v661 = vadd.f32 %v659, %v660
        %v662 = vrot.slane %v661, 2
        %v663 = vadd.f32 %v661, %v662
        %v664 = vrot.slane %v663, 1
        %v665 = vadd.f32 %v663, %v664
        %v666 = vadd.f32 %v616, %v644
        %v667 = vadd.f32 %v619, %v644
        %v668 = vadd.f32 %v622, %v651
        %v669 = vadd.f32 %v625, %v651
        %v670 = vadd.f32 %v628, %v658
        %v671 = vadd.f32 %v631, %v658
        %v672 = vadd.f32 %v634, %v665
        %v673 = vadd.f32 %v637, %v665
        %v674 = vmul.f32 %v343, 2.0
        %v675 = vmul.f32 %v348, 2.0
        %v676 = vmul.f32 %v424, 2.0
        %v677 = vmul.f32 %v429, 2.0
        %v678 = vmul.f32 %v505, 2.0
        %v679 = vmul.f32 %v510, 2.0
        %v680 = vmul.f32 %v586, 2.0
        %v681 = vmul.f32 %v591, 2.0
        %v682 = vsub.f32 %v666, %v674
        %v683 = vsub.f32 %v667, %v675
        %v684 = vsub.f32 %v668, %v676
        %v685 = vsub.f32 %v669, %v677
        %v686 = vsub.f32 %v670, %v678
        %v687 = vsub.f32 %v671, %v679
        %v688 = vsub.f32 %v672, %v680
        %v689 = vsub.f32 %v673, %v681
        %v690 = vmax.f32 %v682, 0.0
        %v691 = vmax.f32 %v683, 0.0
        %v692 = vmax.f32 %v684, 0.0
        %v693 = vmax.f32 %v685, 0.0
        %v694 = vmax.f32 %v686, 0.0
        %v695 = vmax.f32 %v687, 0.0
        %v696 = vmax.f32 %v688, 0.0
        %v697 = vmax.f32 %v689, 0.0
        %v698 = vmul.f32 %v690, -0.11111111
        %v699 = vmul.f32 %v691, -0.11111111
        %v700 = vmul.f32 %v692, -0.11111111
        %v701 = vmul.f32 %v693, -0.11111111
        %v702 = vmul.f32 %v694, -0.11111111
        %v703 = vmul.f32 %v695, -0.11111111
        %v704 = vmul.f32 %v696, -0.11111111
        %v705 = vmul.f32 %v697, -0.11111111
        %v706 = vmul.f32 %v698, 1.442695
        %v707 = vpow.pop %v706
        %v708 = vmul.f32 %v699, 1.442695
        %v709 = vpow.pop %v708
        %v710 = vmul.f32 %v700, 1.442695
        %v711 = vpow.pop %v710
        %v712 = vmul.f32 %v701, 1.442695
        %v713 = vpow.pop %v712
        %v714 = vmul.f32 %v702, 1.442695
        %v715 = vpow.pop %v714
        %v716 = vmul.f32 %v703, 1.442695
        %v717 = vpow.pop %v716
        %v718 = vmul.f32 %v704, 1.442695
        %v719 = vpow.pop %v718
        %v720 = vmul.f32 %v705, 1.442695
        %v721 = vpow.pop %v720
        %v722 = vsel %vm599, -inf, %v707
        %v723 = vsel %vm600, -inf, %v709
        %v724 = vsel %vm599, -inf, %v711
        %v725 = vsel %vm600, -inf, %v713
        %v726 = vsel %vm599, -inf, %v715
        %v727 = vsel %vm600, -inf, %v717
        %v728 = vsel %vm599, -inf, %v719
        %v729 = vsel %vm600, -inf, %v721
        %v730 = vsel %vm613, %v722, -inf
        %731 = vmax.xlane.f32.xlu0 %v730
        %v732 = vpop.xlane.xlu0 %731
        %v733 = vsel %vm613, %v723, -inf
        %734 = vmax.xlane.f32.xlu0 %v733
        %v735 = vpop.xlane.xlu0 %734
        %v736 = vsel %vm613, %v724, -inf
        %737 = vmax.xlane.f32.xlu0 %v736
        %v738 = vpop.xlane.xlu0 %737
        %v739 = vsel %vm613, %v725, -inf
        %740 = vmax.xlane.f32.xlu0 %v739
        %v741 = vpop.xlane.xlu0 %740
        %v742 = vsel %vm613, %v726, -inf
        %743 = vmax.xlane.f32.xlu0 %v742
        %v744 = vpop.xlane.xlu0 %743
        %v745 = vsel %vm613, %v727, -inf
        %746 = vmax.xlane.f32.xlu0 %v745
        %v747 = vpop.xlane.xlu0 %746
        %v748 = vsel %vm613, %v728, -inf
        %749 = vmax.xlane.f32.xlu0 %v748
        %v750 = vpop.xlane.xlu0 %749
        %v751 = vsel %vm613, %v729, -inf
        %752 = vmax.xlane.f32.xlu0 %v751
        %v753 = vpop.xlane.xlu0 %752
        %vm754 = vcmp.ge.f32.partialorder %v722, %v732
        %vm755 = vcmp.ge.f32.partialorder %v723, %v735
        %vm756 = vcmp.ge.f32.partialorder %v724, %v738
        %vm757 = vcmp.ge.f32.partialorder %v725, %v741
        %vm758 = vcmp.ge.f32.partialorder %v726, %v744
        %vm759 = vcmp.ge.f32.partialorder %v727, %v747
        %vm760 = vcmp.ge.f32.partialorder %v728, %v750
        %vm761 = vcmp.ge.f32.partialorder %v729, %v753
        %v762 = vsel %vm754, %v598, 16
        %v763 = vsel %vm755, %v598, 16
        %v764 = vsel %vm756, %v598, 16
        %v765 = vsel %vm757, %v598, 16
        %v766 = vsel %vm758, %v598, 16
        %v767 = vsel %vm759, %v598, 16
        %v768 = vsel %vm760, %v598, 16
        %v769 = vsel %vm761, %v598, 16
        %v770 = vsel %vm613, %v762, 2147483647
        %v771 = vand.u32 %v770, 65535
        %v772 = vshra.s32 %v770, 16
        %v773 = vcvt.s32.f32 %v771
        %v774 = vcvt.s32.f32 %v772
        %775 = vmin.xlane.f32.xlu0 %v774
        %v776 = vpop.xlane.xlu0 %775
        %vm777 = vcmp.eq.f32.partialorder %v774, %v776
        %v778 = vsel %vm777, %v773, inf
        %779 = vmin.xlane.f32.xlu0 %v778
        %v780 = vpop.xlane.xlu0 %779
        %v781 = vcvt.f32.s32 %v780
        %v782 = vcvt.f32.s32 %v776
        %v783 = vshll.u32 %v782, 16
        %v784 = vadd.s32 %v783, %v781
        %v785 = vsel %vm613, %v763, 2147483647
        %v786 = vand.u32 %v785, 65535
        %v787 = vshra.s32 %v785, 16
        %v788 = vcvt.s32.f32 %v786
        %v789 = vcvt.s32.f32 %v787
        %790 = vmin.xlane.f32.xlu0 %v789
        %v791 = vpop.xlane.xlu0 %790
        %vm792 = vcmp.eq.f32.partialorder %v789, %v791
        %v793 = vsel %vm792, %v788, inf
        %794 = vmin.xlane.f32.xlu0 %v793
        %v795 = vpop.xlane.xlu0 %794
        %v796 = vcvt.f32.s32 %v795
        %v797 = vcvt.f32.s32 %v791
        %v798 = vshll.u32 %v797, 16
        %v799 = vadd.s32 %v798, %v796
        %v800 = vsel %vm613, %v764, 2147483647
        %v801 = vand.u32 %v800, 65535
        %v802 = vshra.s32 %v800, 16
        %v803 = vcvt.s32.f32 %v801
        %v804 = vcvt.s32.f32 %v802
        %805 = vmin.xlane.f32.xlu0 %v804
        %v806 = vpop.xlane.xlu0 %805
        %vm807 = vcmp.eq.f32.partialorder %v804, %v806
        %v808 = vsel %vm807, %v803, inf
        %809 = vmin.xlane.f32.xlu0 %v808
        %v810 = vpop.xlane.xlu0 %809
        %v811 = vcvt.f32.s32 %v810
        %v812 = vcvt.f32.s32 %v806
        %v813 = vshll.u32 %v812, 16
        %v814 = vadd.s32 %v813, %v811
        %v815 = vsel %vm613, %v765, 2147483647
        %v816 = vand.u32 %v815, 65535
        %v817 = vshra.s32 %v815, 16
        %v818 = vcvt.s32.f32 %v816
        %v819 = vcvt.s32.f32 %v817
        %820 = vmin.xlane.f32.xlu0 %v819
        %v821 = vpop.xlane.xlu0 %820
        %vm822 = vcmp.eq.f32.partialorder %v819, %v821
        %v823 = vsel %vm822, %v818, inf
        %824 = vmin.xlane.f32.xlu0 %v823
        %v825 = vpop.xlane.xlu0 %824
        %v826 = vcvt.f32.s32 %v825
        %v827 = vcvt.f32.s32 %v821
        %v828 = vshll.u32 %v827, 16
        %v829 = vadd.s32 %v828, %v826
        %v830 = vsel %vm613, %v766, 2147483647
        %v831 = vand.u32 %v830, 65535
        %v832 = vshra.s32 %v830, 16
        %v833 = vcvt.s32.f32 %v831
        %v834 = vcvt.s32.f32 %v832
        %835 = vmin.xlane.f32.xlu0 %v834
        %v836 = vpop.xlane.xlu0 %835
        %vm837 = vcmp.eq.f32.partialorder %v834, %v836
        %v838 = vsel %vm837, %v833, inf
        %839 = vmin.xlane.f32.xlu0 %v838
        %v840 = vpop.xlane.xlu0 %839
        %v841 = vcvt.f32.s32 %v840
        %v842 = vcvt.f32.s32 %v836
        %v843 = vshll.u32 %v842, 16
        %v844 = vadd.s32 %v843, %v841
        %v845 = vsel %vm613, %v767, 2147483647
        %v846 = vand.u32 %v845, 65535
        %v847 = vshra.s32 %v845, 16
        %v848 = vcvt.s32.f32 %v846
        %v849 = vcvt.s32.f32 %v847
        %850 = vmin.xlane.f32.xlu0 %v849
        %v851 = vpop.xlane.xlu0 %850
        %vm852 = vcmp.eq.f32.partialorder %v849, %v851
        %v853 = vsel %vm852, %v848, inf
        %854 = vmin.xlane.f32.xlu0 %v853
        %v855 = vpop.xlane.xlu0 %854
        %v856 = vcvt.f32.s32 %v855
        %v857 = vcvt.f32.s32 %v851
        %v858 = vshll.u32 %v857, 16
        %v859 = vadd.s32 %v858, %v856
        %v860 = vsel %vm613, %v768, 2147483647
        %v861 = vand.u32 %v860, 65535
        %v862 = vshra.s32 %v860, 16
        %v863 = vcvt.s32.f32 %v861
        %v864 = vcvt.s32.f32 %v862
        %865 = vmin.xlane.f32.xlu0 %v864
        %v866 = vpop.xlane.xlu0 %865
        %vm867 = vcmp.eq.f32.partialorder %v864, %v866
        %v868 = vsel %vm867, %v863, inf
        %869 = vmin.xlane.f32.xlu0 %v868
        %v870 = vpop.xlane.xlu0 %869
        %v871 = vcvt.f32.s32 %v870
        %v872 = vcvt.f32.s32 %v866
        %v873 = vshll.u32 %v872, 16
        %v874 = vadd.s32 %v873, %v871
        %v875 = vsel %vm613, %v769, 2147483647
        %v876 = vand.u32 %v875, 65535
        %v877 = vshra.s32 %v875, 16
        %v878 = vcvt.s32.f32 %v876
        %v879 = vcvt.s32.f32 %v877
        %880 = vmin.xlane.f32.xlu0 %v879
        %v881 = vpop.xlane.xlu0 %880
        %vm882 = vcmp.eq.f32.partialorder %v879, %v881
        %v883 = vsel %vm882, %v878, inf
        %884 = vmin.xlane.f32.xlu0 %v883
        %v885 = vpop.xlane.xlu0 %884
        %v886 = vcvt.f32.s32 %v885
        %v887 = vcvt.f32.s32 %v881
        %v888 = vshll.u32 %v887, 16
        %v889 = vadd.s32 %v888, %v886
        %vm890 = vcmp.eq.s32.totalorder %v598, %v784
        %vm891 = vcmp.eq.s32.totalorder %v598, %v799
        %vm892 = vcmp.eq.s32.totalorder %v598, %v814
        %vm893 = vcmp.eq.s32.totalorder %v598, %v829
        %vm894 = vcmp.eq.s32.totalorder %v598, %v844
        %vm895 = vcmp.eq.s32.totalorder %v598, %v859
        %vm896 = vcmp.eq.s32.totalorder %v598, %v874
        %vm897 = vcmp.eq.s32.totalorder %v598, %v889
        %v898 = vsel %vm890, 1, 0
        %v899 = vsel %vm891, 1, 0
        %v900 = vsel %vm892, 1, 0
        %v901 = vsel %vm893, 1, 0
        %v902 = vsel %vm894, 1, 0
        %v903 = vsel %vm895, 1, 0
        %v904 = vsel %vm896, 1, 0
        %v905 = vsel %vm897, 1, 0
        %v906 = vcvt.s32.f32 %v898
        %v907 = vcvt.s32.f32 %v899
        %v908 = vcvt.s32.f32 %v900
        %v909 = vcvt.s32.f32 %v901
        %v910 = vcvt.s32.f32 %v902
        %v911 = vcvt.s32.f32 %v903
        %v912 = vcvt.s32.f32 %v904
        %v913 = vcvt.s32.f32 %v905
        %v914 = vadd.f32 %v603, %v906
        %v915 = vadd.f32 %v604, %v907
        %v916 = vadd.f32 %v603, %v908
        %v917 = vadd.f32 %v604, %v909
        %v918 = vadd.f32 %v603, %v910
        %v919 = vadd.f32 %v604, %v911
        %v920 = vadd.f32 %v603, %v912
        %v921 = vadd.f32 %v604, %v913
        %v922 = vsel %vm890, -inf, %v722
        %v923 = vsel %vm891, -inf, %v723
        %v924 = vsel %vm892, -inf, %v724
        %v925 = vsel %vm893, -inf, %v725
        %v926 = vsel %vm894, -inf, %v726
        %v927 = vsel %vm895, -inf, %v727
        %v928 = vsel %vm896, -inf, %v728
        %v929 = vsel %vm897, -inf, %v729
        %v930 = vsel %vm613, %v922, -inf
        %931 = vmax.xlane.f32.xlu0 %v930
        %v932 = vpop.xlane.xlu0 %931
        %v933 = vsel %vm613, %v923, -inf
        %934 = vmax.xlane.f32.xlu0 %v933
        %v935 = vpop.xlane.xlu0 %934
        %v936 = vsel %vm613, %v924, -inf
        %937 = vmax.xlane.f32.xlu0 %v936
        %v938 = vpop.xlane.xlu0 %937
        %v939 = vsel %vm613, %v925, -inf
        %940 = vmax.xlane.f32.xlu0 %v939
        %v941 = vpop.xlane.xlu0 %940
        %v942 = vsel %vm613, %v926, -inf
        %943 = vmax.xlane.f32.xlu0 %v942
        %v944 = vpop.xlane.xlu0 %943
        %v945 = vsel %vm613, %v927, -inf
        %946 = vmax.xlane.f32.xlu0 %v945
        %v947 = vpop.xlane.xlu0 %946
        %v948 = vsel %vm613, %v928, -inf
        %949 = vmax.xlane.f32.xlu0 %v948
        %v950 = vpop.xlane.xlu0 %949
        %v951 = vsel %vm613, %v929, -inf
        %952 = vmax.xlane.f32.xlu0 %v951
        %v953 = vpop.xlane.xlu0 %952
        %vm954 = vcmp.ge.f32.partialorder %v922, %v932
        %vm955 = vcmp.ge.f32.partialorder %v923, %v935
        %vm956 = vcmp.ge.f32.partialorder %v924, %v938
        %vm957 = vcmp.ge.f32.partialorder %v925, %v941
        %vm958 = vcmp.ge.f32.partialorder %v926, %v944
        %vm959 = vcmp.ge.f32.partialorder %v927, %v947
        %vm960 = vcmp.ge.f32.partialorder %v928, %v950
        %vm961 = vcmp.ge.f32.partialorder %v929, %v953
        %v962 = vsel %vm954, %v598, 16
        %v963 = vsel %vm955, %v598, 16
        %v964 = vsel %vm956, %v598, 16
        %v965 = vsel %vm957, %v598, 16
        %v966 = vsel %vm958, %v598, 16
        %v967 = vsel %vm959, %v598, 16
        %v968 = vsel %vm960, %v598, 16
        %v969 = vsel %vm961, %v598, 16
        %v970 = vsel %vm613, %v962, 2147483647
        %v971 = vand.u32 %v970, 65535
        %v972 = vshra.s32 %v970, 16
        %v973 = vcvt.s32.f32 %v971
        %v974 = vcvt.s32.f32 %v972
        %975 = vmin.xlane.f32.xlu0 %v974
        %v976 = vpop.xlane.xlu0 %975
        %vm977 = vcmp.eq.f32.partialorder %v974, %v976
        %v978 = vsel %vm977, %v973, inf
        %979 = vmin.xlane.f32.xlu0 %v978
        %v980 = vpop.xlane.xlu0 %979
        %v981 = vcvt.f32.s32 %v980
        %v982 = vcvt.f32.s32 %v976
        %v983 = vshll.u32 %v982, 16
        %v984 = vadd.s32 %v983, %v981
        %v985 = vsel %vm613, %v963, 2147483647
        %v986 = vand.u32 %v985, 65535
        %v987 = vshra.s32 %v985, 16
        %v988 = vcvt.s32.f32 %v986
        %v989 = vcvt.s32.f32 %v987
        %990 = vmin.xlane.f32.xlu0 %v989
        %v991 = vpop.xlane.xlu0 %990
        %vm992 = vcmp.eq.f32.partialorder %v989, %v991
        %v993 = vsel %vm992, %v988, inf
        %994 = vmin.xlane.f32.xlu0 %v993
        %v995 = vpop.xlane.xlu0 %994
        %v996 = vcvt.f32.s32 %v995
        %v997 = vcvt.f32.s32 %v991
        %v998 = vshll.u32 %v997, 16
        %v999 = vadd.s32 %v998, %v996
        %v1000 = vsel %vm613, %v964, 2147483647
        %v1001 = vand.u32 %v1000, 65535
        %v1002 = vshra.s32 %v1000, 16
        %v1003 = vcvt.s32.f32 %v1001
        %v1004 = vcvt.s32.f32 %v1002
        %1005 = vmin.xlane.f32.xlu0 %v1004
        %v1006 = vpop.xlane.xlu0 %1005
        %vm1007 = vcmp.eq.f32.partialorder %v1004, %v1006
        %v1008 = vsel %vm1007, %v1003, inf
        %1009 = vmin.xlane.f32.xlu0 %v1008
        %v1010 = vpop.xlane.xlu0 %1009
        %v1011 = vcvt.f32.s32 %v1010
        %v1012 = vcvt.f32.s32 %v1006
        %v1013 = vshll.u32 %v1012, 16
        %v1014 = vadd.s32 %v1013, %v1011
        %v1015 = vsel %vm613, %v965, 2147483647
        %v1016 = vand.u32 %v1015, 65535
        %v1017 = vshra.s32 %v1015, 16
        %v1018 = vcvt.s32.f32 %v1016
        %v1019 = vcvt.s32.f32 %v1017
        %1020 = vmin.xlane.f32.xlu0 %v1019
        %v1021 = vpop.xlane.xlu0 %1020
        %vm1022 = vcmp.eq.f32.partialorder %v1019, %v1021
        %v1023 = vsel %vm1022, %v1018, inf
        %1024 = vmin.xlane.f32.xlu0 %v1023
        %v1025 = vpop.xlane.xlu0 %1024
        %v1026 = vcvt.f32.s32 %v1025
        %v1027 = vcvt.f32.s32 %v1021
        %v1028 = vshll.u32 %v1027, 16
        %v1029 = vadd.s32 %v1028, %v1026
        %v1030 = vsel %vm613, %v966, 2147483647
        %v1031 = vand.u32 %v1030, 65535
        %v1032 = vshra.s32 %v1030, 16
        %v1033 = vcvt.s32.f32 %v1031
        %v1034 = vcvt.s32.f32 %v1032
        %1035 = vmin.xlane.f32.xlu0 %v1034
        %v1036 = vpop.xlane.xlu0 %1035
        %vm1037 = vcmp.eq.f32.partialorder %v1034, %v1036
        %v1038 = vsel %vm1037, %v1033, inf
        %1039 = vmin.xlane.f32.xlu0 %v1038
        %v1040 = vpop.xlane.xlu0 %1039
        %v1041 = vcvt.f32.s32 %v1040
        %v1042 = vcvt.f32.s32 %v1036
        %v1043 = vshll.u32 %v1042, 16
        %v1044 = vadd.s32 %v1043, %v1041
        %v1045 = vsel %vm613, %v967, 2147483647
        %v1046 = vand.u32 %v1045, 65535
        %v1047 = vshra.s32 %v1045, 16
        %v1048 = vcvt.s32.f32 %v1046
        %v1049 = vcvt.s32.f32 %v1047
        %1050 = vmin.xlane.f32.xlu0 %v1049
        %v1051 = vpop.xlane.xlu0 %1050
        %vm1052 = vcmp.eq.f32.partialorder %v1049, %v1051
        %v1053 = vsel %vm1052, %v1048, inf
        %1054 = vmin.xlane.f32.xlu0 %v1053
        %v1055 = vpop.xlane.xlu0 %1054
        %v1056 = vcvt.f32.s32 %v1055
        %v1057 = vcvt.f32.s32 %v1051
        %v1058 = vshll.u32 %v1057, 16
        %v1059 = vadd.s32 %v1058, %v1056
        %v1060 = vsel %vm613, %v968, 2147483647
        %v1061 = vand.u32 %v1060, 65535
        %v1062 = vshra.s32 %v1060, 16
        %v1063 = vcvt.s32.f32 %v1061
        %v1064 = vcvt.s32.f32 %v1062
        %1065 = vmin.xlane.f32.xlu0 %v1064
        %v1066 = vpop.xlane.xlu0 %1065
        %vm1067 = vcmp.eq.f32.partialorder %v1064, %v1066
        %v1068 = vsel %vm1067, %v1063, inf
        %1069 = vmin.xlane.f32.xlu0 %v1068
        %v1070 = vpop.xlane.xlu0 %1069
        %v1071 = vcvt.f32.s32 %v1070
        %v1072 = vcvt.f32.s32 %v1066
        %v1073 = vshll.u32 %v1072, 16
        %v1074 = vadd.s32 %v1073, %v1071
        %v1075 = vsel %vm613, %v969, 2147483647
        %v1076 = vand.u32 %v1075, 65535
        %v1077 = vshra.s32 %v1075, 16
        %v1078 = vcvt.s32.f32 %v1076
        %v1079 = vcvt.s32.f32 %v1077
        %1080 = vmin.xlane.f32.xlu0 %v1079
        %v1081 = vpop.xlane.xlu0 %1080
        %vm1082 = vcmp.eq.f32.partialorder %v1079, %v1081
        %v1083 = vsel %vm1082, %v1078, inf
        %1084 = vmin.xlane.f32.xlu0 %v1083
        %v1085 = vpop.xlane.xlu0 %1084
        %v1086 = vcvt.f32.s32 %v1085
        %v1087 = vcvt.f32.s32 %v1081
        %v1088 = vshll.u32 %v1087, 16
        %v1089 = vadd.s32 %v1088, %v1086
        %vm1090 = vcmp.eq.s32.totalorder %v598, %v984
        %vm1091 = vcmp.eq.s32.totalorder %v598, %v999
        %vm1092 = vcmp.eq.s32.totalorder %v598, %v1014
        %vm1093 = vcmp.eq.s32.totalorder %v598, %v1029
        %vm1094 = vcmp.eq.s32.totalorder %v598, %v1044
        %vm1095 = vcmp.eq.s32.totalorder %v598, %v1059
        %vm1096 = vcmp.eq.s32.totalorder %v598, %v1074
        %vm1097 = vcmp.eq.s32.totalorder %v598, %v1089
        %v1098 = vsel %vm1090, 1, 0
        %v1099 = vsel %vm1091, 1, 0
        %v1100 = vsel %vm1092, 1, 0
        %v1101 = vsel %vm1093, 1, 0
        %v1102 = vsel %vm1094, 1, 0
        %v1103 = vsel %vm1095, 1, 0
        %v1104 = vsel %vm1096, 1, 0
        %v1105 = vsel %vm1097, 1, 0
        %v1106 = vcvt.s32.f32 %v1098
        %v1107 = vcvt.s32.f32 %v1099
        %v1108 = vcvt.s32.f32 %v1100
        %v1109 = vcvt.s32.f32 %v1101
        %v1110 = vcvt.s32.f32 %v1102
        %v1111 = vcvt.s32.f32 %v1103
        %v1112 = vcvt.s32.f32 %v1104
        %v1113 = vcvt.s32.f32 %v1105
        %v1114 = vadd.f32 %v914, %v1106
        %v1115 = vadd.f32 %v915, %v1107
        %v1116 = vadd.f32 %v916, %v1108
        %v1117 = vadd.f32 %v917, %v1109
        %v1118 = vadd.f32 %v918, %v1110
        %v1119 = vadd.f32 %v919, %v1111
        %v1120 = vadd.f32 %v920, %v1112
        %v1121 = vadd.f32 %v921, %v1113
        %v1122 = vsel %vm1090, -inf, %v922
        %v1123 = vsel %vm1091, -inf, %v923
        %v1124 = vsel %vm1092, -inf, %v924
        %v1125 = vsel %vm1093, -inf, %v925
        %v1126 = vsel %vm1094, -inf, %v926
        %v1127 = vsel %vm1095, -inf, %v927
        %v1128 = vsel %vm1096, -inf, %v928
        %v1129 = vsel %vm1097, -inf, %v929
        %v1130 = vsel %vm613, %v1122, -inf
        %1131 = vmax.xlane.f32.xlu0 %v1130
        %v1132 = vpop.xlane.xlu0 %1131
        %v1133 = vsel %vm613, %v1123, -inf
        %1134 = vmax.xlane.f32.xlu0 %v1133
        %v1135 = vpop.xlane.xlu0 %1134
        %v1136 = vsel %vm613, %v1124, -inf
        %1137 = vmax.xlane.f32.xlu0 %v1136
        %v1138 = vpop.xlane.xlu0 %1137
        %v1139 = vsel %vm613, %v1125, -inf
        %1140 = vmax.xlane.f32.xlu0 %v1139
        %v1141 = vpop.xlane.xlu0 %1140
        %v1142 = vsel %vm613, %v1126, -inf
        %1143 = vmax.xlane.f32.xlu0 %v1142
        %v1144 = vpop.xlane.xlu0 %1143
        %v1145 = vsel %vm613, %v1127, -inf
        %1146 = vmax.xlane.f32.xlu0 %v1145
        %v1147 = vpop.xlane.xlu0 %1146
        %v1148 = vsel %vm613, %v1128, -inf
        %1149 = vmax.xlane.f32.xlu0 %v1148
        %v1150 = vpop.xlane.xlu0 %1149
        %v1151 = vsel %vm613, %v1129, -inf
        %1152 = vmax.xlane.f32.xlu0 %v1151
        %v1153 = vpop.xlane.xlu0 %1152
        %vm1154 = vcmp.ge.f32.partialorder %v1122, %v1132
        %vm1155 = vcmp.ge.f32.partialorder %v1123, %v1135
        %vm1156 = vcmp.ge.f32.partialorder %v1124, %v1138
        %vm1157 = vcmp.ge.f32.partialorder %v1125, %v1141
        %vm1158 = vcmp.ge.f32.partialorder %v1126, %v1144
        %vm1159 = vcmp.ge.f32.partialorder %v1127, %v1147
        %vm1160 = vcmp.ge.f32.partialorder %v1128, %v1150
        %vm1161 = vcmp.ge.f32.partialorder %v1129, %v1153
        %v1162 = vsel %vm1154, %v598, 16
        %v1163 = vsel %vm1155, %v598, 16
        %v1164 = vsel %vm1156, %v598, 16
        %v1165 = vsel %vm1157, %v598, 16
        %v1166 = vsel %vm1158, %v598, 16
        %v1167 = vsel %vm1159, %v598, 16
        %v1168 = vsel %vm1160, %v598, 16
        %v1169 = vsel %vm1161, %v598, 16
        %v1170 = vsel %vm613, %v1162, 2147483647
        %v1171 = vand.u32 %v1170, 65535
        %v1172 = vshra.s32 %v1170, 16
        %v1173 = vcvt.s32.f32 %v1171
        %v1174 = vcvt.s32.f32 %v1172
        %1175 = vmin.xlane.f32.xlu0 %v1174
        %v1176 = vpop.xlane.xlu0 %1175
        %vm1177 = vcmp.eq.f32.partialorder %v1174, %v1176
        %v1178 = vsel %vm1177, %v1173, inf
        %1179 = vmin.xlane.f32.xlu0 %v1178
        %v1180 = vpop.xlane.xlu0 %1179
        %v1181 = vcvt.f32.s32 %v1180
        %v1182 = vcvt.f32.s32 %v1176
        %v1183 = vshll.u32 %v1182, 16
        %v1184 = vadd.s32 %v1183, %v1181
        %v1185 = vsel %vm613, %v1163, 2147483647
        %v1186 = vand.u32 %v1185, 65535
        %v1187 = vshra.s32 %v1185, 16
        %v1188 = vcvt.s32.f32 %v1186
        %v1189 = vcvt.s32.f32 %v1187
        %1190 = vmin.xlane.f32.xlu0 %v1189
        %v1191 = vpop.xlane.xlu0 %1190
        %vm1192 = vcmp.eq.f32.partialorder %v1189, %v1191
        %v1193 = vsel %vm1192, %v1188, inf
        %1194 = vmin.xlane.f32.xlu0 %v1193
        %v1195 = vpop.xlane.xlu0 %1194
        %v1196 = vcvt.f32.s32 %v1195
        %v1197 = vcvt.f32.s32 %v1191
        %v1198 = vshll.u32 %v1197, 16
        %v1199 = vadd.s32 %v1198, %v1196
        %v1200 = vsel %vm613, %v1164, 2147483647
        %v1201 = vand.u32 %v1200, 65535
        %v1202 = vshra.s32 %v1200, 16
        %v1203 = vcvt.s32.f32 %v1201
        %v1204 = vcvt.s32.f32 %v1202
        %1205 = vmin.xlane.f32.xlu0 %v1204
        %v1206 = vpop.xlane.xlu0 %1205
        %vm1207 = vcmp.eq.f32.partialorder %v1204, %v1206
        %v1208 = vsel %vm1207, %v1203, inf
        %1209 = vmin.xlane.f32.xlu0 %v1208
        %v1210 = vpop.xlane.xlu0 %1209
        %v1211 = vcvt.f32.s32 %v1210
        %v1212 = vcvt.f32.s32 %v1206
        %v1213 = vshll.u32 %v1212, 16
        %v1214 = vadd.s32 %v1213, %v1211
        %v1215 = vsel %vm613, %v1165, 2147483647
        %v1216 = vand.u32 %v1215, 65535
        %v1217 = vshra.s32 %v1215, 16
        %v1218 = vcvt.s32.f32 %v1216
        %v1219 = vcvt.s32.f32 %v1217
        %1220 = vmin.xlane.f32.xlu0 %v1219
        %v1221 = vpop.xlane.xlu0 %1220
        %vm1222 = vcmp.eq.f32.partialorder %v1219, %v1221
        %v1223 = vsel %vm1222, %v1218, inf
        %1224 = vmin.xlane.f32.xlu0 %v1223
        %v1225 = vpop.xlane.xlu0 %1224
        %v1226 = vcvt.f32.s32 %v1225
        %v1227 = vcvt.f32.s32 %v1221
        %v1228 = vshll.u32 %v1227, 16
        %v1229 = vadd.s32 %v1228, %v1226
        %v1230 = vsel %vm613, %v1166, 2147483647
        %v1231 = vand.u32 %v1230, 65535
        %v1232 = vshra.s32 %v1230, 16
        %v1233 = vcvt.s32.f32 %v1231
        %v1234 = vcvt.s32.f32 %v1232
        %1235 = vmin.xlane.f32.xlu0 %v1234
        %v1236 = vpop.xlane.xlu0 %1235
        %vm1237 = vcmp.eq.f32.partialorder %v1234, %v1236
        %v1238 = vsel %vm1237, %v1233, inf
        %1239 = vmin.xlane.f32.xlu0 %v1238
        %v1240 = vpop.xlane.xlu0 %1239
        %v1241 = vcvt.f32.s32 %v1240
        %v1242 = vcvt.f32.s32 %v1236
        %v1243 = vshll.u32 %v1242, 16
        %v1244 = vadd.s32 %v1243, %v1241
        %v1245 = vsel %vm613, %v1167, 2147483647
        %v1246 = vand.u32 %v1245, 65535
        %v1247 = vshra.s32 %v1245, 16
        %v1248 = vcvt.s32.f32 %v1246
        %v1249 = vcvt.s32.f32 %v1247
        %1250 = vmin.xlane.f32.xlu0 %v1249
        %v1251 = vpop.xlane.xlu0 %1250
        %vm1252 = vcmp.eq.f32.partialorder %v1249, %v1251
        %v1253 = vsel %vm1252, %v1248, inf
        %1254 = vmin.xlane.f32.xlu0 %v1253
        %v1255 = vpop.xlane.xlu0 %1254
        %v1256 = vcvt.f32.s32 %v1255
        %v1257 = vcvt.f32.s32 %v1251
        %v1258 = vshll.u32 %v1257, 16
        %v1259 = vadd.s32 %v1258, %v1256
        %v1260 = vsel %vm613, %v1168, 2147483647
        %v1261 = vand.u32 %v1260, 65535
        %v1262 = vshra.s32 %v1260, 16
        %v1263 = vcvt.s32.f32 %v1261
        %v1264 = vcvt.s32.f32 %v1262
        %1265 = vmin.xlane.f32.xlu0 %v1264
        %v1266 = vpop.xlane.xlu0 %1265
        %vm1267 = vcmp.eq.f32.partialorder %v1264, %v1266
        %v1268 = vsel %vm1267, %v1263, inf
        %1269 = vmin.xlane.f32.xlu0 %v1268
        %v1270 = vpop.xlane.xlu0 %1269
        %v1271 = vcvt.f32.s32 %v1270
        %v1272 = vcvt.f32.s32 %v1266
        %v1273 = vshll.u32 %v1272, 16
        %v1274 = vadd.s32 %v1273, %v1271
        %v1275 = vsel %vm613, %v1169, 2147483647
        %v1276 = vand.u32 %v1275, 65535
        %v1277 = vshra.s32 %v1275, 16
        %v1278 = vcvt.s32.f32 %v1276
        %v1279 = vcvt.s32.f32 %v1277
        %1280 = vmin.xlane.f32.xlu0 %v1279
        %v1281 = vpop.xlane.xlu0 %1280
        %vm1282 = vcmp.eq.f32.partialorder %v1279, %v1281
        %v1283 = vsel %vm1282, %v1278, inf
        %1284 = vmin.xlane.f32.xlu0 %v1283
        %v1285 = vpop.xlane.xlu0 %1284
        %v1286 = vcvt.f32.s32 %v1285
        %v1287 = vcvt.f32.s32 %v1281
        %v1288 = vshll.u32 %v1287, 16
        %v1289 = vadd.s32 %v1288, %v1286
        %vm1290 = vcmp.eq.s32.totalorder %v598, %v1184
        %vm1291 = vcmp.eq.s32.totalorder %v598, %v1199
        %vm1292 = vcmp.eq.s32.totalorder %v598, %v1214
        %vm1293 = vcmp.eq.s32.totalorder %v598, %v1229
        %vm1294 = vcmp.eq.s32.totalorder %v598, %v1244
        %vm1295 = vcmp.eq.s32.totalorder %v598, %v1259
        %vm1296 = vcmp.eq.s32.totalorder %v598, %v1274
        %vm1297 = vcmp.eq.s32.totalorder %v598, %v1289
        %v1298 = vsel %vm1290, 1, 0
        %v1299 = vsel %vm1291, 1, 0
        %v1300 = vsel %vm1292, 1, 0
        %v1301 = vsel %vm1293, 1, 0
        %v1302 = vsel %vm1294, 1, 0
        %v1303 = vsel %vm1295, 1, 0
        %v1304 = vsel %vm1296, 1, 0
        %v1305 = vsel %vm1297, 1, 0
        %v1306 = vcvt.s32.f32 %v1298
        %v1307 = vcvt.s32.f32 %v1299
        %v1308 = vcvt.s32.f32 %v1300
        %v1309 = vcvt.s32.f32 %v1301
        %v1310 = vcvt.s32.f32 %v1302
        %v1311 = vcvt.s32.f32 %v1303
        %v1312 = vcvt.s32.f32 %v1304
        %v1313 = vcvt.s32.f32 %v1305
        %v1314 = vadd.f32 %v1114, %v1306
        %v1315 = vadd.f32 %v1115, %v1307
        %v1316 = vadd.f32 %v1116, %v1308
        %v1317 = vadd.f32 %v1117, %v1309
        %v1318 = vadd.f32 %v1118, %v1310
        %v1319 = vadd.f32 %v1119, %v1311
        %v1320 = vadd.f32 %v1120, %v1312
        %v1321 = vadd.f32 %v1121, %v1313
        %v1322 = vsub.f32 %v1314, %v603
        %v1323 = vsub.f32 %v1315, %v604
        %v1324 = vsub.f32 %v1316, %v603
        %v1325 = vsub.f32 %v1317, %v604
        %v1326 = vsub.f32 %v1318, %v603
        %v1327 = vsub.f32 %v1319, %v604
        %v1328 = vsub.f32 %v1320, %v603
        %v1329 = vsub.f32 %v1321, %v604
        %v1330 = vmul.f32 %v1322, %v707
        %v1331 = vmul.f32 %v1323, %v709
        %v1332 = vmul.f32 %v1324, %v711
        %v1333 = vmul.f32 %v1325, %v713
        %v1334 = vmul.f32 %v1326, %v715
        %v1335 = vmul.f32 %v1327, %v717
        %v1336 = vmul.f32 %v1328, %v719
        %v1337 = vmul.f32 %v1329, %v721
        %v1338 = vadd.f32 %v603, %v1330
        %v1339 = vadd.f32 %v604, %v1331
        %v1340 = vadd.f32 %v603, %v1332
        %v1341 = vadd.f32 %v604, %v1333
        %v1342 = vadd.f32 %v603, %v1334
        %v1343 = vadd.f32 %v604, %v1335
        %v1344 = vadd.f32 %v603, %v1336
        %v1345 = vadd.f32 %v604, %v1337
        %v1346 = vsel %vm613, %v1338, 0.0
        %1347 = vadd.xlane.f32.xlu0 %v1346
        %v1348 = vpop.xlane.xlu0 %1347
        %v1349 = vsel %vm613, %v1339, 0.0
        %1350 = vadd.xlane.f32.xlu0 %v1349
        %v1351 = vpop.xlane.xlu0 %1350
        %v1352 = vsel %vm613, %v1340, 0.0
        %1353 = vadd.xlane.f32.xlu0 %v1352
        %v1354 = vpop.xlane.xlu0 %1353
        %v1355 = vsel %vm613, %v1341, 0.0
        %1356 = vadd.xlane.f32.xlu0 %v1355
        %v1357 = vpop.xlane.xlu0 %1356
        %v1358 = vsel %vm613, %v1342, 0.0
        %1359 = vadd.xlane.f32.xlu0 %v1358
        %v1360 = vpop.xlane.xlu0 %1359
        %v1361 = vsel %vm613, %v1343, 0.0
        %1362 = vadd.xlane.f32.xlu0 %v1361
        %v1363 = vpop.xlane.xlu0 %1362
        %v1364 = vsel %vm613, %v1344, 0.0
        %1365 = vadd.xlane.f32.xlu0 %v1364
        %v1366 = vpop.xlane.xlu0 %1365
        %v1367 = vsel %vm613, %v1345, 0.0
        %1368 = vadd.xlane.f32.xlu0 %v1367
        %v1369 = vpop.xlane.xlu0 %1368
        %v1370 = vadd.f32 %v1348, 1.0
        %v1371 = vadd.f32 %v1351, 1.0
        %v1372 = vadd.f32 %v1354, 1.0
        %v1373 = vadd.f32 %v1357, 1.0
        %v1374 = vadd.f32 %v1360, 1.0
        %v1375 = vadd.f32 %v1363, 1.0
        %v1376 = vadd.f32 %v1366, 1.0
        %v1377 = vadd.f32 %v1369, 1.0
        %v1378 = vrsqrt.pop %v1370
        %v1379 = vrsqrt.pop %v1371
        %v1380 = vrsqrt.pop %v1372
        %v1381 = vrsqrt.pop %v1373
        %v1382 = vrsqrt.pop %v1374
        %v1383 = vrsqrt.pop %v1375
        %v1384 = vrsqrt.pop %v1376
        %v1385 = vrsqrt.pop %v1377
        %v1386 = vmul.f32 %v1378, %v1378
        %v1387 = vmul.f32 %v1379, %v1379
        %v1388 = vmul.f32 %v1380, %v1380
        %v1389 = vmul.f32 %v1381, %v1381
        %v1390 = vmul.f32 %v1382, %v1382
        %v1391 = vmul.f32 %v1383, %v1383
        %v1392 = vmul.f32 %v1384, %v1384
        %v1393 = vmul.f32 %v1385, %v1385
        %s1394 = sld [smem:[#allocation9]]
        %s1395 = sld [smem:[#allocation9 + $0x1]]
        %s1396 = sld [smem:[#allocation9 + $0x2]]
        %v1397 = vpack.c.bf16 %v1339, %v1338
        %v1398 = vpack.c.bf16 %v1341, %v1340
        %v1399 = vpack.c.bf16 %v1343, %v1342
        %v1400 = vpack.c.bf16 %v1345, %v1344
        %v1401 = vmul.f32 %v261, %v1378
        %v1402 = vmul.f32 %v262, %v1379
        %v1403 = vmul.f32 %v263, %v1380
        %v1404 = vmul.f32 %v264, %v1381
        %v1405 = vmul.f32 %v265, %v1382
        %v1406 = vmul.f32 %v266, %v1383
        %v1407 = vmul.f32 %v267, %v1384
        %v1408 = vmul.f32 %v268, %v1385
        %v1409 = vpack.c.bf16 %v1402, %v1401
        %v1410 = vpack.c.bf16 %v1404, %v1403
        %v1411 = vpack.c.bf16 %v1406, %v1405
        %v1412 = vpack.c.bf16 %v1408, %v1407
        %v1414 = vsel %vm613, %v1397, 0
        %1416 = vmatprep.subr.bf16.mxu0 0
        %1417 = vmatpush1.bf16.msra.mxu0 0
        %1418 = vmatprep.subr.bf16.mxu0 0
        %1419 = vmatpush1.bf16.msra.mxu0 0
        %1420 = vmatprep.subr.bf16.mxu0 0
        %1421 = vmatpush1.bf16.msra.mxu0 0
        %1422 = vmatprep.subr.bf16.mxu0 0
        %1423 = vmatpush1.bf16.msra.mxu0 0
        %1424 = vmatprep.subr.bf16.mxu0 0
        %1425 = vmatpush1.bf16.msra.mxu0 0
        %1426 = vmatprep.subr.bf16.mxu0 0
        %1427 = vmatpush1.bf16.msra.mxu0 0
        %1428 = vmatprep.subr.bf16.mxu0 0
        %1429 = vmatpush1.bf16.msra.mxu0 0
        %1430 = vmatprep.subr.bf16.mxu0 0
        %1431 = vmatpush1.bf16.msra.mxu0 %v1409
        %1432 = vmatprep.subr.bf16.mxu0 0
        %1433 = vmatpush2.bf16.msra.mxu0 0
        %1434 = vmatprep.subr.bf16.mxu0 0
        %1435 = vmatpush2.bf16.msra.mxu0 0
        %1436 = vmatprep.subr.bf16.mxu0 0
        %1437 = vmatpush2.bf16.msra.mxu0 0
        %1438 = vmatprep.subr.bf16.mxu0 0
        %1439 = vmatpush2.bf16.msra.mxu0 0
        %1440 = vmatprep.subr.bf16.mxu0 0
        %1441 = vmatpush2.bf16.msra.mxu0 0
        %1442 = vmatprep.subr.bf16.mxu0 0
        %1443 = vmatpush2.bf16.msra.mxu0 0
        %1444 = vmatprep.subr.bf16.mxu0 0
        %1445 = vmatpush2.bf16.msra.mxu0 0
        %1446 = vmatprep.subr.bf16.mxu0 0
        %1447 = vmatpush2.bf16.msra.mxu0 0
        %1448 = vmatprep.mubr.bf16.mxu0 0
        %1449 = vmatmul.mubr.bf16.gmra.mxu0 %v1414
        %v1450 = vpop.f32.mrf.mxu0
        %v1451 = vadd.f32 0.0, %v1450
        %v1452 = vpop.f32.mrf.mxu0
        %v1453 = vpop.f32.mrf.mxu0
        %v1454 = vadd.f32 0.0, %v1453
        %v1455 = vpop.f32.mrf.mxu0
        %1456 = vdwg.mxu0
        %v1458 = vsel %vm613, %v1398, 0
        %1460 = vmatprep.subr.bf16.mxu0 0
        %1461 = vmatpush1.bf16.msra.mxu0 0
        %1462 = vmatprep.subr.bf16.mxu0 0
        %1463 = vmatpush1.bf16.msra.mxu0 0
        %1464 = vmatprep.subr.bf16.mxu0 0
        %1465 = vmatpush1.bf16.msra.mxu0 0
        %1466 = vmatprep.subr.bf16.mxu0 0
        %1467 = vmatpush1.bf16.msra.mxu0 0
        %1468 = vmatprep.subr.bf16.mxu0 0
        %1469 = vmatpush1.bf16.msra.mxu0 0
        %1470 = vmatprep.subr.bf16.mxu0 0
        %1471 = vmatpush1.bf16.msra.mxu0 0
        %1472 = vmatprep.subr.bf16.mxu0 0
        %1473 = vmatpush1.bf16.msra.mxu0 0
        %1474 = vmatprep.subr.bf16.mxu0 0
        %1475 = vmatpush1.bf16.msra.mxu0 %v1410
        %1476 = vmatprep.subr.bf16.mxu0 0
        %1477 = vmatpush2.bf16.msra.mxu0 0
        %1478 = vmatprep.subr.bf16.mxu0 0
        %1479 = vmatpush2.bf16.msra.mxu0 0
        %1480 = vmatprep.subr.bf16.mxu0 0
        %1481 = vmatpush2.bf16.msra.mxu0 0
        %1482 = vmatprep.subr.bf16.mxu0 0
        %1483 = vmatpush2.bf16.msra.mxu0 0
        %1484 = vmatprep.subr.bf16.mxu0 0
        %1485 = vmatpush2.bf16.msra.mxu0 0
        %1486 = vmatprep.subr.bf16.mxu0 0
        %1487 = vmatpush2.bf16.msra.mxu0 0
        %1488 = vmatprep.subr.bf16.mxu0 0
        %1489 = vmatpush2.bf16.msra.mxu0 0
        %1490 = vmatprep.subr.bf16.mxu0 0
        %1491 = vmatpush2.bf16.msra.mxu0 0
        %1492 = vmatprep.mubr.bf16.mxu0 0
        %1493 = vmatmul.mubr.bf16.gmra.mxu0 %v1458
        %v1494 = vpop.f32.mrf.mxu0
        %v1495 = vadd.f32 0.0, %v1494
        %v1496 = vpop.f32.mrf.mxu0
        %v1497 = vpop.f32.mrf.mxu0
        %v1498 = vadd.f32 0.0, %v1497
        %v1499 = vpop.f32.mrf.mxu0
        %1500 = vdwg.mxu0
        %v1502 = vsel %vm613, %v1399, 0
        %1504 = vmatprep.subr.bf16.mxu0 0
        %1505 = vmatpush1.bf16.msra.mxu0 0
        %1506 = vmatprep.subr.bf16.mxu0 0
        %1507 = vmatpush1.bf16.msra.mxu0 0
        %1508 = vmatprep.subr.bf16.mxu0 0
        %1509 = vmatpush1.bf16.msra.mxu0 0
        %1510 = vmatprep.subr.bf16.mxu0 0
        %1511 = vmatpush1.bf16.msra.mxu0 0
        %1512 = vmatprep.subr.bf16.mxu0 0
        %1513 = vmatpush1.bf16.msra.mxu0 0
        %1514 = vmatprep.subr.bf16.mxu0 0
        %1515 = vmatpush1.bf16.msra.mxu0 0
        %1516 = vmatprep.subr.bf16.mxu0 0
        %1517 = vmatpush1.bf16.msra.mxu0 0
        %1518 = vmatprep.subr.bf16.mxu0 0
        %1519 = vmatpush1.bf16.msra.mxu0 %v1411
        %1520 = vmatprep.subr.bf16.mxu0 0
        %1521 = vmatpush2.bf16.msra.mxu0 0
        %1522 = vmatprep.subr.bf16.mxu0 0
        %1523 = vmatpush2.bf16.msra.mxu0 0
        %1524 = vmatprep.subr.bf16.mxu0 0
        %1525 = vmatpush2.bf16.msra.mxu0 0
        %1526 = vmatprep.subr.bf16.mxu0 0
        %1527 = vmatpush2.bf16.msra.mxu0 0
        %1528 = vmatprep.subr.bf16.mxu0 0
        %1529 = vmatpush2.bf16.msra.mxu0 0
        %1530 = vmatprep.subr.bf16.mxu0 0
        %1531 = vmatpush2.bf16.msra.mxu0 0
        %1532 = vmatprep.subr.bf16.mxu0 0
        %1533 = vmatpush2.bf16.msra.mxu0 0
        %1534 = vmatprep.subr.bf16.mxu0 0
        %1535 = vmatpush2.bf16.msra.mxu0 0
        %1536 = vmatprep.mubr.bf16.mxu0 0
        %1537 = vmatmul.mubr.bf16.gmra.mxu0 %v1502
        %v1538 = vpop.f32.mrf.mxu0
        %v1539 = vadd.f32 0.0, %v1538
        %v1540 = vpop.f32.mrf.mxu0
        %v1541 = vpop.f32.mrf.mxu0
        %v1542 = vadd.f32 0.0, %v1541
        %v1543 = vpop.f32.mrf.mxu0
        %1544 = vdwg.mxu0
        %v1546 = vsel %vm613, %v1400, 0
        %1548 = vmatprep.subr.bf16.mxu0 0
        %1549 = vmatpush1.bf16.msra.mxu0 0
        %1550 = vmatprep.subr.bf16.mxu0 0
        %1551 = vmatpush1.bf16.msra.mxu0 0
        %1552 = vmatprep.subr.bf16.mxu0 0
        %1553 = vmatpush1.bf16.msra.mxu0 0
        %1554 = vmatprep.subr.bf16.mxu0 0
        %1555 = vmatpush1.bf16.msra.mxu0 0
        %1556 = vmatprep.subr.bf16.mxu0 0
        %1557 = vmatpush1.bf16.msra.mxu0 0
        %1558 = vmatprep.subr.bf16.mxu0 0
        %1559 = vmatpush1.bf16.msra.mxu0 0
        %1560 = vmatprep.subr.bf16.mxu0 0
        %1561 = vmatpush1.bf16.msra.mxu0 0
        %1562 = vmatprep.subr.bf16.mxu0 0
        %1563 = vmatpush1.bf16.msra.mxu0 %v1412
        %1564 = vmatprep.subr.bf16.mxu0 0
        %1565 = vmatpush2.bf16.msra.mxu0 0
        %1566 = vmatprep.subr.bf16.mxu0 0
        %1567 = vmatpush2.bf16.msra.mxu0 0
        %1568 = vmatprep.subr.bf16.mxu0 0
        %1569 = vmatpush2.bf16.msra.mxu0 0
        %1570 = vmatprep.subr.bf16.mxu0 0
        %1571 = vmatpush2.bf16.msra.mxu0 0
        %1572 = vmatprep.subr.bf16.mxu0 0
        %1573 = vmatpush2.bf16.msra.mxu0 0
        %1574 = vmatprep.subr.bf16.mxu0 0
        %1575 = vmatpush2.bf16.msra.mxu0 0
        %1576 = vmatprep.subr.bf16.mxu0 0
        %1577 = vmatpush2.bf16.msra.mxu0 0
        %1578 = vmatprep.subr.bf16.mxu0 0
        %1579 = vmatpush2.bf16.msra.mxu0 0
        %1580 = vmatprep.mubr.bf16.mxu0 0
        %1581 = vmatmul.mubr.bf16.gmra.mxu0 %v1546
        %v1582 = vpop.f32.mrf.mxu0
        %v1583 = vadd.f32 0.0, %v1582
        %v1584 = vpop.f32.mrf.mxu0
        %v1585 = vpop.f32.mrf.mxu0
        %v1586 = vadd.f32 0.0, %v1585
        %v1587 = vpop.f32.mrf.mxu0
        %1588 = vdwg.mxu0
        %v1589 = vmul.f32 %v1451, %v1378
        %v1590 = vmul.f32 %v1454, %v1379
        %v1591 = vmul.f32 %v1495, %v1380
        %v1592 = vmul.f32 %v1498, %v1381
        %v1593 = vmul.f32 %v1539, %v1382
        %v1594 = vmul.f32 %v1542, %v1383
        %v1595 = vmul.f32 %v1583, %v1384
        %v1596 = vmul.f32 %v1586, %v1385
        %v1597 = vmul.f32 %v1451, %v1386
        %v1598 = vmul.f32 %v1454, %v1387
        %v1599 = vmul.f32 %v1495, %v1388
        %v1600 = vmul.f32 %v1498, %v1389
        %v1601 = vmul.f32 %v1539, %v1390
        %v1602 = vmul.f32 %v1542, %v1391
        %v1603 = vmul.f32 %v1583, %v1392
        %v1604 = vmul.f32 %v1586, %v1393
        %v1605 = vpack.c.bf16 %v1598, %v1597
        %v1606 = vpack.c.bf16 %v1600, %v1599
        %v1607 = vpack.c.bf16 %v1602, %v1601
        %v1608 = vpack.c.bf16 %v1604, %v1603
        %1609 = vmatprep.subr.bf16.mxu0 0
        %1610 = vmatpush1.bf16.msra.mxu0 0
        %1611 = vmatprep.subr.bf16.mxu0 0
        %1612 = vmatpush1.bf16.msra.mxu0 0
        %1613 = vmatprep.subr.bf16.mxu0 0
        %1614 = vmatpush1.bf16.msra.mxu0 0
        %1615 = vmatprep.subr.bf16.mxu0 0
        %1616 = vmatpush1.bf16.msra.mxu0 0
        %1617 = vmatprep.subr.bf16.mxu0 0
        %1618 = vmatpush1.bf16.msra.mxu0 0
        %1619 = vmatprep.subr.bf16.mxu0 0
        %1620 = vmatpush1.bf16.msra.mxu0 0
        %1621 = vmatprep.subr.bf16.mxu0 0
        %1622 = vmatpush1.bf16.msra.mxu0 0
        %1623 = vmatprep.subr.bf16.mxu0 0
        %1624 = vmatpush1.bf16.msra.mxu0 %v1605
        %1625 = vmatprep.subr.bf16.mxu0 0
        %1626 = vmatpush2.bf16.msra.mxu0 0
        %1627 = vmatprep.subr.bf16.mxu0 0
        %1628 = vmatpush2.bf16.msra.mxu0 0
        %1629 = vmatprep.subr.bf16.mxu0 0
        %1630 = vmatpush2.bf16.msra.mxu0 0
        %1631 = vmatprep.subr.bf16.mxu0 0
        %1632 = vmatpush2.bf16.msra.mxu0 0
        %1633 = vmatprep.subr.bf16.mxu0 0
        %1634 = vmatpush2.bf16.msra.mxu0 0
        %1635 = vmatprep.subr.bf16.mxu0 0
        %1636 = vmatpush2.bf16.msra.mxu0 0
        %1637 = vmatprep.subr.bf16.mxu0 0
        %1638 = vmatpush2.bf16.msra.mxu0 0
        %1639 = vmatprep.subr.bf16.mxu0 0
        %1640 = vmatpush2.bf16.msra.mxu0 0
        %1641 = vmatprep.mubr.bf16.mxu0 0
        %1642 = vmatmul.mubr.bf16.gmra.mxu0 %v1414
        %v1643 = vpop.f32.mrf.mxu0
        %v1644 = vadd.f32 0.0, %v1643
        %v1645 = vpop.f32.mrf.mxu0
        %v1646 = vpop.f32.mrf.mxu0
        %v1647 = vadd.f32 0.0, %v1646
        %v1648 = vpop.f32.mrf.mxu0
        %1649 = vdwg.mxu0
        %1650 = vmatprep.subr.bf16.mxu0 0
        %1651 = vmatpush1.bf16.msra.mxu0 0
        %1652 = vmatprep.subr.bf16.mxu0 0
        %1653 = vmatpush1.bf16.msra.mxu0 0
        %1654 = vmatprep.subr.bf16.mxu0 0
        %1655 = vmatpush1.bf16.msra.mxu0 0
        %1656 = vmatprep.subr.bf16.mxu0 0
        %1657 = vmatpush1.bf16.msra.mxu0 0
        %1658 = vmatprep.subr.bf16.mxu0 0
        %1659 = vmatpush1.bf16.msra.mxu0 0
        %1660 = vmatprep.subr.bf16.mxu0 0
        %1661 = vmatpush1.bf16.msra.mxu0 0
        %1662 = vmatprep.subr.bf16.mxu0 0
        %1663 = vmatpush1.bf16.msra.mxu0 0
        %1664 = vmatprep.subr.bf16.mxu0 0
        %1665 = vmatpush1.bf16.msra.mxu0 %v1606
        %1666 = vmatprep.subr.bf16.mxu0 0
        %1667 = vmatpush2.bf16.msra.mxu0 0
        %1668 = vmatprep.subr.bf16.mxu0 0
        %1669 = vmatpush2.bf16.msra.mxu0 0
        %1670 = vmatprep.subr.bf16.mxu0 0
        %1671 = vmatpush2.bf16.msra.mxu0 0
        %1672 = vmatprep.subr.bf16.mxu0 0
        %1673 = vmatpush2.bf16.msra.mxu0 0
        %1674 = vmatprep.subr.bf16.mxu0 0
        %1675 = vmatpush2.bf16.msra.mxu0 0
        %1676 = vmatprep.subr.bf16.mxu0 0
        %1677 = vmatpush2.bf16.msra.mxu0 0
        %1678 = vmatprep.subr.bf16.mxu0 0
        %1679 = vmatpush2.bf16.msra.mxu0 0
        %1680 = vmatprep.subr.bf16.mxu0 0
        %1681 = vmatpush2.bf16.msra.mxu0 0
        %1682 = vmatprep.mubr.bf16.mxu0 0
        %1683 = vmatmul.mubr.bf16.gmra.mxu0 %v1458
        %v1684 = vpop.f32.mrf.mxu0
        %v1685 = vadd.f32 0.0, %v1684
        %v1686 = vpop.f32.mrf.mxu0
        %v1687 = vpop.f32.mrf.mxu0
        %v1688 = vadd.f32 0.0, %v1687
        %v1689 = vpop.f32.mrf.mxu0
        %1690 = vdwg.mxu0
        %1691 = vmatprep.subr.bf16.mxu0 0
        %1692 = vmatpush1.bf16.msra.mxu0 0
        %1693 = vmatprep.subr.bf16.mxu0 0
        %1694 = vmatpush1.bf16.msra.mxu0 0
        %1695 = vmatprep.subr.bf16.mxu0 0
        %1696 = vmatpush1.bf16.msra.mxu0 0
        %1697 = vmatprep.subr.bf16.mxu0 0
        %1698 = vmatpush1.bf16.msra.mxu0 0
        %1699 = vmatprep.subr.bf16.mxu0 0
        %1700 = vmatpush1.bf16.msra.mxu0 0
        %1701 = vmatprep.subr.bf16.mxu0 0
        %1702 = vmatpush1.bf16.msra.mxu0 0
        %1703 = vmatprep.subr.bf16.mxu0 0
        %1704 = vmatpush1.bf16.msra.mxu0 0
        %1705 = vmatprep.subr.bf16.mxu0 0
        %1706 = vmatpush1.bf16.msra.mxu0 %v1607
        %1707 = vmatprep.subr.bf16.mxu0 0
        %1708 = vmatpush2.bf16.msra.mxu0 0
        %1709 = vmatprep.subr.bf16.mxu0 0
        %1710 = vmatpush2.bf16.msra.mxu0 0
        %1711 = vmatprep.subr.bf16.mxu0 0
        %1712 = vmatpush2.bf16.msra.mxu0 0
        %1713 = vmatprep.subr.bf16.mxu0 0
        %1714 = vmatpush2.bf16.msra.mxu0 0
        %1715 = vmatprep.subr.bf16.mxu0 0
        %1716 = vmatpush2.bf16.msra.mxu0 0
        %1717 = vmatprep.subr.bf16.mxu0 0
        %1718 = vmatpush2.bf16.msra.mxu0 0
        %1719 = vmatprep.subr.bf16.mxu0 0
        %1720 = vmatpush2.bf16.msra.mxu0 0
        %1721 = vmatprep.subr.bf16.mxu0 0
        %1722 = vmatpush2.bf16.msra.mxu0 0
        %1723 = vmatprep.mubr.bf16.mxu0 0
        %1724 = vmatmul.mubr.bf16.gmra.mxu0 %v1502
        %v1725 = vpop.f32.mrf.mxu0
        %v1726 = vadd.f32 0.0, %v1725
        %v1727 = vpop.f32.mrf.mxu0
        %v1728 = vpop.f32.mrf.mxu0
        %v1729 = vadd.f32 0.0, %v1728
        %v1730 = vpop.f32.mrf.mxu0
        %1731 = vdwg.mxu0
        %1732 = vmatprep.subr.bf16.mxu0 0
        %1733 = vmatpush1.bf16.msra.mxu0 0
        %1734 = vmatprep.subr.bf16.mxu0 0
        %1735 = vmatpush1.bf16.msra.mxu0 0
        %1736 = vmatprep.subr.bf16.mxu0 0
        %1737 = vmatpush1.bf16.msra.mxu0 0
        %1738 = vmatprep.subr.bf16.mxu0 0
        %1739 = vmatpush1.bf16.msra.mxu0 0
        %1740 = vmatprep.subr.bf16.mxu0 0
        %1741 = vmatpush1.bf16.msra.mxu0 0
        %1742 = vmatprep.subr.bf16.mxu0 0
        %1743 = vmatpush1.bf16.msra.mxu0 0
        %1744 = vmatprep.subr.bf16.mxu0 0
        %1745 = vmatpush1.bf16.msra.mxu0 0
        %1746 = vmatprep.subr.bf16.mxu0 0
        %1747 = vmatpush1.bf16.msra.mxu0 %v1608
        %1748 = vmatprep.subr.bf16.mxu0 0
        %1749 = vmatpush2.bf16.msra.mxu0 0
        %1750 = vmatprep.subr.bf16.mxu0 0
        %1751 = vmatpush2.bf16.msra.mxu0 0
        %1752 = vmatprep.subr.bf16.mxu0 0
        %1753 = vmatpush2.bf16.msra.mxu0 0
        %1754 = vmatprep.subr.bf16.mxu0 0
        %1755 = vmatpush2.bf16.msra.mxu0 0
        %1756 = vmatprep.subr.bf16.mxu0 0
        %1757 = vmatpush2.bf16.msra.mxu0 0
        %1758 = vmatprep.subr.bf16.mxu0 0
        %1759 = vmatpush2.bf16.msra.mxu0 0
        %1760 = vmatprep.subr.bf16.mxu0 0
        %1761 = vmatpush2.bf16.msra.mxu0 0
        %1762 = vmatprep.subr.bf16.mxu0 0
        %1763 = vmatpush2.bf16.msra.mxu0 0
        %1764 = vmatprep.mubr.bf16.mxu0 0
        %1765 = vmatmul.mubr.bf16.gmra.mxu0 %v1546
        %v1766 = vpop.f32.mrf.mxu0
        %v1767 = vadd.f32 0.0, %v1766
        %v1768 = vpop.f32.mrf.mxu0
        %v1769 = vpop.f32.mrf.mxu0
        %v1770 = vadd.f32 0.0, %v1769
        %v1771 = vpop.f32.mrf.mxu0
        %1772 = vdwg.mxu0
        %v1773 = vmul.f32 %v1644, %v1378
        %v1774 = vmul.f32 %v1647, %v1379
        %v1775 = vmul.f32 %v1685, %v1380
        %v1776 = vmul.f32 %v1688, %v1381
        %v1777 = vmul.f32 %v1726, %v1382
        %v1778 = vmul.f32 %v1729, %v1383
        %v1779 = vmul.f32 %v1767, %v1384
        %v1780 = vmul.f32 %v1770, %v1385
        %v1781 = vstv %s1394
        %v1782 = vmul.f32 %v1781, %v261
        %v1783 = vmul.f32 %v1781, %v262
        %v1784 = vmul.f32 %v1781, %v263
        %v1785 = vmul.f32 %v1781, %v264
        %v1786 = vmul.f32 %v1781, %v265
        %v1787 = vmul.f32 %v1781, %v266
        %v1788 = vmul.f32 %v1781, %v267
        %v1789 = vmul.f32 %v1781, %v268
        %v1790 = vstv %s1395
        %v1791 = vmul.f32 %v1790, %v1589
        %v1792 = vmul.f32 %v1790, %v1590
        %v1793 = vmul.f32 %v1790, %v1591
        %v1794 = vmul.f32 %v1790, %v1592
        %v1795 = vmul.f32 %v1790, %v1593
        %v1796 = vmul.f32 %v1790, %v1594
        %v1797 = vmul.f32 %v1790, %v1595
        %v1798 = vmul.f32 %v1790, %v1596
        %v1799 = vadd.f32 %v1782, %v1791
        %v1800 = vadd.f32 %v1783, %v1792
        %v1801 = vadd.f32 %v1784, %v1793
        %v1802 = vadd.f32 %v1785, %v1794
        %v1803 = vadd.f32 %v1786, %v1795
        %v1804 = vadd.f32 %v1787, %v1796
        %v1805 = vadd.f32 %v1788, %v1797
        %v1806 = vadd.f32 %v1789, %v1798
        %v1807 = vstv %s1396
        %v1808 = vmul.f32 %v1807, %v1773
        %v1809 = vmul.f32 %v1807, %v1774
        %v1810 = vmul.f32 %v1807, %v1775
        %v1811 = vmul.f32 %v1807, %v1776
        %v1812 = vmul.f32 %v1807, %v1777
        %v1813 = vmul.f32 %v1807, %v1778
        %v1814 = vmul.f32 %v1807, %v1779
        %v1815 = vmul.f32 %v1807, %v1780
        %v1816 = vadd.f32 %v1799, %v1808
        %v1817 = vadd.f32 %v1800, %v1809
        %v1818 = vadd.f32 %v1801, %v1810
        %v1819 = vadd.f32 %v1802, %v1811
        %v1820 = vadd.f32 %v1803, %v1812
        %v1821 = vadd.f32 %v1804, %v1813
        %v1822 = vadd.f32 %v1805, %v1814
        %v1823 = vadd.f32 %v1806, %v1815
        %v1824 = vpack.c.bf16 %v1817, %v1816
        %v1825 = vpack.c.bf16 %v1819, %v1818
        %v1826 = vpack.c.bf16 %v1821, %v1820
        %v1827 = vpack.c.bf16 %v1823, %v1822
        %v1828 = vld [vmem:[#allocation6] sm:$0xff]
        %v1829 = vld [vmem:[#allocation6 + $0x8] sm:$0xff]
        %v1830 = vld [vmem:[#allocation6 + $0x10] sm:$0xff]
        %v1831 = vld [vmem:[#allocation6 + $0x18] sm:$0xff]
        %v1832 = vld [vmem:[#allocation6 + $0x20] sm:$0xff]
        %v1833 = vld [vmem:[#allocation6 + $0x28] sm:$0xff]
        %v1834 = vld [vmem:[#allocation6 + $0x30] sm:$0xff]
        %v1835 = vld [vmem:[#allocation6 + $0x38] sm:$0xff]
        %v1836 = vld [vmem:[#allocation6 + $0x40] sm:$0xff]
        %v1837 = vld [vmem:[#allocation6 + $0x48] sm:$0xff]
        %v1838 = vld [vmem:[#allocation6 + $0x50] sm:$0xff]
        %v1839 = vld [vmem:[#allocation6 + $0x58] sm:$0xff]
        %v1840 = vld [vmem:[#allocation6 + $0x60] sm:$0xff]
        %v1841 = vld [vmem:[#allocation6 + $0x68] sm:$0xff]
        %v1842 = vld [vmem:[#allocation6 + $0x70] sm:$0xff]
        %v1843 = vld [vmem:[#allocation6 + $0x78] sm:$0xff]
        %v1844 = vld [vmem:[#allocation8] sm:$0xf]
        %v1846 = vlaneseq
        %v1847 = vshrl.u32 %v1846, 7
        %v1848 = vsub.s32 0, %v1847
        %v1849 = vrot.slane %v1844, %v1848
        %v1850 = vlaneseq
        %v1851 = vshrl.u32 %v1850, 7
        %v1852 = vsub.s32 1, %v1851
        %v1853 = vrot.slane %v1844, %v1852
        %v1854 = vlaneseq
        %v1855 = vshrl.u32 %v1854, 7
        %v1856 = vsub.s32 2, %v1855
        %v1857 = vrot.slane %v1844, %v1856
        %v1858 = vlaneseq
        %v1859 = vshrl.u32 %v1858, 7
        %v1860 = vsub.s32 3, %v1859
        %v1861 = vrot.slane %v1844, %v1860
        %v1882 = vunpack.c.l.b16 %v1828
        %v1883 = vunpack.c.h.b16 %v1828
        %v1884 = vunpack.c.l.b16 %v1829
        %v1885 = vunpack.c.h.b16 %v1829
        %v1886 = vunpack.c.l.b16 %v1830
        %v1887 = vunpack.c.h.b16 %v1830
        %v1888 = vunpack.c.l.b16 %v1831
        %v1889 = vunpack.c.h.b16 %v1831
        %v1890 = vunpack.c.l.b16 %v1832
        %v1891 = vunpack.c.h.b16 %v1832
        %v1892 = vunpack.c.l.b16 %v1833
        %v1893 = vunpack.c.h.b16 %v1833
        %v1894 = vunpack.c.l.b16 %v1834
        %v1895 = vunpack.c.h.b16 %v1834
        %v1896 = vunpack.c.l.b16 %v1835
        %v1897 = vunpack.c.h.b16 %v1835
        %v1898 = vunpack.c.l.b16 %v1836
        %v1899 = vunpack.c.h.b16 %v1836
        %v1900 = vunpack.c.l.b16 %v1837
        %v1901 = vunpack.c.h.b16 %v1837
        %v1902 = vunpack.c.l.b16 %v1838
        %v1903 = vunpack.c.h.b16 %v1838
        %v1904 = vunpack.c.l.b16 %v1839
        %v1905 = vunpack.c.h.b16 %v1839
        %v1906 = vunpack.c.l.b16 %v1840
        %v1907 = vunpack.c.h.b16 %v1840
        %v1908 = vunpack.c.l.b16 %v1841
        %v1909 = vunpack.c.h.b16 %v1841
        %v1910 = vunpack.c.l.b16 %v1842
        %v1911 = vunpack.c.h.b16 %v1842
        %v1912 = vunpack.c.l.b16 %v1843
        %v1913 = vunpack.c.h.b16 %v1843
        %v1914 = vpack.c.b16 %v1886, %v1882
        %v1915 = vpack.c.b16 %v1887, %v1883
        %v1916 = vpack.c.b16 %v1888, %v1884
        %v1917 = vpack.c.b16 %v1889, %v1885
        %v1918 = vpack.c.b16 %v1894, %v1890
        %v1919 = vpack.c.b16 %v1895, %v1891
        %v1920 = vpack.c.b16 %v1896, %v1892
        %v1921 = vpack.c.b16 %v1897, %v1893
        %v1922 = vpack.c.b16 %v1902, %v1898
        %v1923 = vpack.c.b16 %v1903, %v1899
        %v1924 = vpack.c.b16 %v1904, %v1900
        %v1925 = vpack.c.b16 %v1905, %v1901
        %v1926 = vpack.c.b16 %v1910, %v1906
        %v1927 = vpack.c.b16 %v1911, %v1907
        %v1928 = vpack.c.b16 %v1912, %v1908
        %v1929 = vpack.c.b16 %v1913, %v1909
        %v1947 = vsel %vm269, %v1824, 0
        %v1950 = vsel %vm269, %v1825, 0
        %v1953 = vsel %vm269, %v1826, 0
        %v1956 = vsel %vm269, %v1827, 0
        %1958 = vmatprep.subr.bf16.mxu0 0
        %1959 = vmatpush1.bf16.msra.mxu0 0
        %1960 = vmatprep.subr.bf16.mxu0 0
        %1961 = vmatpush1.bf16.msra.mxu0 0
        %1962 = vmatprep.subr.bf16.mxu0 0
        %1963 = vmatpush1.bf16.msra.mxu0 0
        %1964 = vmatprep.subr.bf16.mxu0 0
        %1965 = vmatpush1.bf16.msra.mxu0 0
        %1966 = vmatprep.subr.bf16.mxu0 %v1927
        %1967 = vmatpush1.bf16.msra.mxu0 %v1926
        %1968 = vmatprep.subr.bf16.mxu0 %v1923
        %1969 = vmatpush1.bf16.msra.mxu0 %v1922
        %1970 = vmatprep.subr.bf16.mxu0 %v1919
        %1971 = vmatpush1.bf16.msra.mxu0 %v1918
        %1972 = vmatprep.subr.bf16.mxu0 %v1915
        %1973 = vmatpush1.bf16.msra.mxu0 %v1914
        %1974 = vmatprep.subr.bf16.mxu0 0
        %1975 = vmatpush2.bf16.msra.mxu0 0
        %1976 = vmatprep.subr.bf16.mxu0 0
        %1977 = vmatpush2.bf16.msra.mxu0 0
        %1978 = vmatprep.subr.bf16.mxu0 0
        %1979 = vmatpush2.bf16.msra.mxu0 0
        %1980 = vmatprep.subr.bf16.mxu0 0
        %1981 = vmatpush2.bf16.msra.mxu0 0
        %1982 = vmatprep.subr.bf16.mxu0 0
        %1983 = vmatpush2.bf16.msra.mxu0 0
        %1984 = vmatprep.subr.bf16.mxu0 0
        %1985 = vmatpush2.bf16.msra.mxu0 0
        %1986 = vmatprep.subr.bf16.mxu0 0
        %1987 = vmatpush2.bf16.msra.mxu0 0
        %1988 = vmatprep.subr.bf16.mxu0 0
        %1989 = vmatpush2.bf16.msra.mxu0 0
        %1990 = vmatprep.mubr.bf16.mxu0 0
        %1991 = vmatmul.mubr.bf16.gmra.mxu0 %v1947
        %v1992 = vpop.f32.mrf.mxu0
        %v1993 = vadd.f32 %v1849, %v1992
        %v1994 = vpop.f32.mrf.mxu0
        %v1995 = vadd.f32 %v1853, %v1994
        %v1996 = vpop.f32.mrf.mxu0
        %v1997 = vadd.f32 %v1849, %v1996
        %v1998 = vpop.f32.mrf.mxu0
        %v1999 = vadd.f32 %v1853, %v1998
        %2000 = vmatprep.mubr.bf16.mxu0 0
        %2001 = vmatmul.mubr.bf16.gmra.mxu0 %v1950
        %v2002 = vpop.f32.mrf.mxu0
        %v2003 = vadd.f32 %v1849, %v2002
        %v2004 = vpop.f32.mrf.mxu0
        %v2005 = vadd.f32 %v1853, %v2004
        %v2006 = vpop.f32.mrf.mxu0
        %v2007 = vadd.f32 %v1849, %v2006
        %v2008 = vpop.f32.mrf.mxu0
        %v2009 = vadd.f32 %v1853, %v2008
        %2010 = vmatprep.mubr.bf16.mxu0 0
        %2011 = vmatmul.mubr.bf16.gmra.mxu0 %v1953
        %v2012 = vpop.f32.mrf.mxu0
        %v2013 = vadd.f32 %v1849, %v2012
        %v2014 = vpop.f32.mrf.mxu0
        %v2015 = vadd.f32 %v1853, %v2014
        %v2016 = vpop.f32.mrf.mxu0
        %v2017 = vadd.f32 %v1849, %v2016
        %v2018 = vpop.f32.mrf.mxu0
        %v2019 = vadd.f32 %v1853, %v2018
        %2020 = vmatprep.mubr.bf16.mxu0 0
        %2021 = vmatmul.mubr.bf16.gmra.mxu0 %v1956
        %v2022 = vpop.f32.mrf.mxu0
        %v2023 = vadd.f32 %v1849, %v2022
        %v2024 = vpop.f32.mrf.mxu0
        %v2025 = vadd.f32 %v1853, %v2024
        %v2026 = vpop.f32.mrf.mxu0
        %v2027 = vadd.f32 %v1849, %v2026
        %v2028 = vpop.f32.mrf.mxu0
        %v2029 = vadd.f32 %v1853, %v2028
        %2030 = vdwg.mxu0
        %2031 = vmatprep.subr.bf16.mxu0 0
        %2032 = vmatpush1.bf16.msra.mxu0 0
        %2033 = vmatprep.subr.bf16.mxu0 0
        %2034 = vmatpush1.bf16.msra.mxu0 0
        %2035 = vmatprep.subr.bf16.mxu0 0
        %2036 = vmatpush1.bf16.msra.mxu0 0
        %2037 = vmatprep.subr.bf16.mxu0 0
        %2038 = vmatpush1.bf16.msra.mxu0 0
        %2039 = vmatprep.subr.bf16.mxu0 %v1929
        %2040 = vmatpush1.bf16.msra.mxu0 %v1928
        %2041 = vmatprep.subr.bf16.mxu0 %v1925
        %2042 = vmatpush1.bf16.msra.mxu0 %v1924
        %2043 = vmatprep.subr.bf16.mxu0 %v1921
        %2044 = vmatpush1.bf16.msra.mxu0 %v1920
        %2045 = vmatprep.subr.bf16.mxu0 %v1917
        %2046 = vmatpush1.bf16.msra.mxu0 %v1916
        %2047 = vmatprep.subr.bf16.mxu0 0
        %2048 = vmatpush2.bf16.msra.mxu0 0
        %2049 = vmatprep.subr.bf16.mxu0 0
        %2050 = vmatpush2.bf16.msra.mxu0 0
        %2051 = vmatprep.subr.bf16.mxu0 0
        %2052 = vmatpush2.bf16.msra.mxu0 0
        %2053 = vmatprep.subr.bf16.mxu0 0
        %2054 = vmatpush2.bf16.msra.mxu0 0
        %2055 = vmatprep.subr.bf16.mxu0 0
        %2056 = vmatpush2.bf16.msra.mxu0 0
        %2057 = vmatprep.subr.bf16.mxu0 0
        %2058 = vmatpush2.bf16.msra.mxu0 0
        %2059 = vmatprep.subr.bf16.mxu0 0
        %2060 = vmatpush2.bf16.msra.mxu0 0
        %2061 = vmatprep.subr.bf16.mxu0 0
        %2062 = vmatpush2.bf16.msra.mxu0 0
        %2063 = vmatprep.mubr.bf16.mxu0 0
        %2064 = vmatmul.mubr.bf16.gmra.mxu0 %v1947
        %v2065 = vpop.f32.mrf.mxu0
        %v2066 = vadd.f32 %v1857, %v2065
        %v2067 = vpop.f32.mrf.mxu0
        %v2068 = vadd.f32 %v1861, %v2067
        %v2069 = vpop.f32.mrf.mxu0
        %v2070 = vadd.f32 %v1857, %v2069
        %v2071 = vpop.f32.mrf.mxu0
        %v2072 = vadd.f32 %v1861, %v2071
        %2073 = vmatprep.mubr.bf16.mxu0 0
        %2074 = vmatmul.mubr.bf16.gmra.mxu0 %v1950
        %v2075 = vpop.f32.mrf.mxu0
        %v2076 = vadd.f32 %v1857, %v2075
        %v2077 = vpop.f32.mrf.mxu0
        %v2078 = vadd.f32 %v1861, %v2077
        %v2079 = vpop.f32.mrf.mxu0
        %v2080 = vadd.f32 %v1857, %v2079
        %v2081 = vpop.f32.mrf.mxu0
        %v2082 = vadd.f32 %v1861, %v2081
        %2083 = vmatprep.mubr.bf16.mxu0 0
        %2084 = vmatmul.mubr.bf16.gmra.mxu0 %v1953
        %v2085 = vpop.f32.mrf.mxu0
        %v2086 = vadd.f32 %v1857, %v2085
        %v2087 = vpop.f32.mrf.mxu0
        %v2088 = vadd.f32 %v1861, %v2087
        %v2089 = vpop.f32.mrf.mxu0
        %v2090 = vadd.f32 %v1857, %v2089
        %v2091 = vpop.f32.mrf.mxu0
        %v2092 = vadd.f32 %v1861, %v2091
        %2093 = vmatprep.mubr.bf16.mxu0 0
        %2094 = vmatmul.mubr.bf16.gmra.mxu0 %v1956
        %v2095 = vpop.f32.mrf.mxu0
        %v2096 = vadd.f32 %v1857, %v2095
        %v2097 = vpop.f32.mrf.mxu0
        %v2098 = vadd.f32 %v1861, %v2097
        %v2099 = vpop.f32.mrf.mxu0
        %v2100 = vadd.f32 %v1857, %v2099
        %v2101 = vpop.f32.mrf.mxu0
        %v2102 = vadd.f32 %v1861, %v2101
        %2103 = vdwg.mxu0
        %v2104 = vmax.f32 %v1993, 0.0
        %v2105 = vmax.f32 %v1995, 0.0
        %v2106 = vmax.f32 %v2066, 0.0
        %v2107 = vmax.f32 %v2068, 0.0
        %v2108 = vmax.f32 %v1997, 0.0
        %v2109 = vmax.f32 %v1999, 0.0
        %v2110 = vmax.f32 %v2070, 0.0
        %v2111 = vmax.f32 %v2072, 0.0
        %v2112 = vmax.f32 %v2003, 0.0
        %v2113 = vmax.f32 %v2005, 0.0
        %v2114 = vmax.f32 %v2076, 0.0
        %v2115 = vmax.f32 %v2078, 0.0
        %v2116 = vmax.f32 %v2007, 0.0
        %v2117 = vmax.f32 %v2009, 0.0
        %v2118 = vmax.f32 %v2080, 0.0
        %v2119 = vmax.f32 %v2082, 0.0
        %v2120 = vmax.f32 %v2013, 0.0
        %v2121 = vmax.f32 %v2015, 0.0
        %v2122 = vmax.f32 %v2086, 0.0
        %v2123 = vmax.f32 %v2088, 0.0
        %v2124 = vmax.f32 %v2017, 0.0
        %v2125 = vmax.f32 %v2019, 0.0
        %v2126 = vmax.f32 %v2090, 0.0
        %v2127 = vmax.f32 %v2092, 0.0
        %v2128 = vmax.f32 %v2023, 0.0
        %v2129 = vmax.f32 %v2025, 0.0
        %v2130 = vmax.f32 %v2096, 0.0
        %v2131 = vmax.f32 %v2098, 0.0
        %v2132 = vmax.f32 %v2027, 0.0
        %v2133 = vmax.f32 %v2029, 0.0
        %v2134 = vmax.f32 %v2100, 0.0
        %v2135 = vmax.f32 %v2102, 0.0
        %2136 = vst [vmem:[%s257] sm:$0xff] %v2104
        %2137 = vst [vmem:[%s257 + $0x8] sm:$0xff] %v2105
        %2138 = vst [vmem:[%s257 + $0x10] sm:$0xff] %v2106
        %2139 = vst [vmem:[%s257 + $0x18] sm:$0xff] %v2107
        %2140 = vst [vmem:[%s257 + $0x20] sm:$0xff] %v2108
        %2141 = vst [vmem:[%s257 + $0x28] sm:$0xff] %v2109
        %2142 = vst [vmem:[%s257 + $0x30] sm:$0xff] %v2110
        %2143 = vst [vmem:[%s257 + $0x38] sm:$0xff] %v2111
        %2144 = vst [vmem:[%s257 + $0x40] sm:$0xff] %v2112
        %2145 = vst [vmem:[%s257 + $0x48] sm:$0xff] %v2113
        %2146 = vst [vmem:[%s257 + $0x50] sm:$0xff] %v2114
        %2147 = vst [vmem:[%s257 + $0x58] sm:$0xff] %v2115
        %2148 = vst [vmem:[%s257 + $0x60] sm:$0xff] %v2116
        %2149 = vst [vmem:[%s257 + $0x68] sm:$0xff] %v2117
        %2150 = vst [vmem:[%s257 + $0x70] sm:$0xff] %v2118
        %2151 = vst [vmem:[%s257 + $0x78] sm:$0xff] %v2119
        %2152 = vst [vmem:[%s257 + $0x80] sm:$0xff] %v2120
        %2153 = vst [vmem:[%s257 + $0x88] sm:$0xff] %v2121
        %2154 = vst [vmem:[%s257 + $0x90] sm:$0xff] %v2122
        %2155 = vst [vmem:[%s257 + $0x98] sm:$0xff] %v2123
        %2156 = vst [vmem:[%s257 + $0xa0] sm:$0xff] %v2124
        %2157 = vst [vmem:[%s257 + $0xa8] sm:$0xff] %v2125
        %2158 = vst [vmem:[%s257 + $0xb0] sm:$0xff] %v2126
        %2159 = vst [vmem:[%s257 + $0xb8] sm:$0xff] %v2127
        %2160 = vst [vmem:[%s257 + $0xc0] sm:$0xff] %v2128
        %2161 = vst [vmem:[%s257 + $0xc8] sm:$0xff] %v2129
        %2162 = vst [vmem:[%s257 + $0xd0] sm:$0xff] %v2130
        %2163 = vst [vmem:[%s257 + $0xd8] sm:$0xff] %v2131
        %2164 = vst [vmem:[%s257 + $0xe0] sm:$0xff] %v2132
        %2165 = vst [vmem:[%s257 + $0xe8] sm:$0xff] %v2133
        %2166 = vst [vmem:[%s257 + $0xf0] sm:$0xff] %v2134
        %2167 = vst [vmem:[%s257 + $0xf8] sm:$0xff] %v2135
        %s2168 = sand.u32 %s120, 1
        %s2169 = scalar_lea.sflag [#allocation4], %s2168
        %s2170 = sand.u32 %s120, 1
        %s2171 = smul.addr %s2170, 256
        %s2172 = scalar_lea.vmem [#allocation10], %s2171
        // Predicated region
        $region53: #{tpu_custom_call.1} parent=35 // pred_check
          %p2173 = pneg %p130
        $region54: #{tpu_custom_call.1} parent=35 // pred_check_branch
          %2175 = sbr.rel (%p2173) target = $region56
        $region55: #{tpu_custom_call.1} parent=35 // pred_region
          %s2176 = smul.u32 8, %s23
          %s2178 = ssub.s32 4096, 4096
          %2179 = vsyncadd %s2169, %s2178
          %s2180 = smul.addr %s2176, 4
          %s2181 = smul.addr %s2180, 128
          %s2182 = scalar_lea.hbm %s4, %s2181
          %s2183 = sshll.u32 %s2172, 4
          %s2184 = int_to_ptr.vmem [resolvable:$true] %s2183
          %2189 = dma.vmem_to_hbm [thread:$0]  %s2184, 4096, %s2182, %s2169, 512, 512, 32
        $region56: #{tpu_custom_call.1} parent=35 // pred_fallthru
          _
      $region36: #{tpu_custom_call.1} parent=5 // pred_fallthru
        _
      %p2190 = scmp.le.s32.totalorder 2, %s18
      // Predicated region
      $region57: #{tpu_custom_call.1} parent=5 // pred_check
        %p2191 = pneg %p2190
      $region58: #{tpu_custom_call.1} parent=5 // pred_check_branch
        %2193 = sbr.rel (%p2191) target = $region60
      $region59: #{tpu_custom_call.1} parent=5 // pred_region
        %s2194 = ssub.s32 %s18, 2
        // Predicated region
        $region61: #{tpu_custom_call.1} parent=59 // pred_check
          %p2195 = pneg %p136
        $region62: #{tpu_custom_call.1} parent=59 // pred_check_branch
          %2197 = sbr.rel (%p2195) target = $region64
        $region63: #{tpu_custom_call.1} parent=59 // pred_region
          %s2198 = sand.u32 %s121, 1
          %s2199 = scalar_lea.sflag [#allocation4], %s2198
          %s2200 = sand.u32 %s121, 1
          %s2201 = smul.addr %s2200, 256
          %s2202 = scalar_lea.vmem [#allocation10], %s2201
          %2203 = dma.done %s2199, 4096
        $region64: #{tpu_custom_call.1} parent=59 // pred_fallthru
          _
      $region60: #{tpu_custom_call.1} parent=5 // pred_fallthru
        _
    $region6: #{tpu_custom_call.1} parent=1 // loop_footer
      %s22 = sadd.s32 1, %s18
    $region7: #{tpu_custom_call.1} parent=1 // loop_footer_branch
      %17 = sbr.rel target = $region3
    $region8: #{tpu_custom_call.1} parent=1 // loop_exit
      _
    %2204 = vsyncpa [#allocation3], 1
    %s2205 = scalar_lea.sflag [#allocation3], 1
    %2206 = vsyncpa %s2205, 1
    %2207 = vsyncpa [#allocation7], 1
    %2208 = vsyncpa [#allocation4], 1
    %s2209 = scalar_lea.sflag [#allocation4], 1
    %2210 = vsyncpa %s2209, 1
    %2211 = vsyncpa [#allocation5], 1
    %s2212 = scalar_lea.sflag [#allocation5], 1
    %2213 = vsyncpa %s2212, 1

</llo_original>
